<compile_context>
chip_gen: v6e
topology: v6e:2x2x1
jax: 0.10.0
libtpu: 0.0.40
codegen_flags: <defaults>
</compile_context>

<pallas_src>
import functools

import jax
import jax.numpy as jnp
from jax import lax
from jax.experimental import pallas as pl
from jax.experimental.pallas import tpu as pltpu

LANE = 128
C_IN, C_MID, C_OUT = 4, 8, 1


def mycnn_kernel(w1_ref, b1_ref, w2_ref, b2_ref, w3_ref, b3_ref,  # SMEM (scalar prefetch)
                 x_ref,                                           # VMEM (C_IN, tile_r, 128)
                 o_ref,                                           # VMEM (tile_r, 128)
                 *, inner, compute_dtype):
    tile_r = o_ref.shape[0]
    cdt = compute_dtype

    # ---- Prologue: hoist ALL weight/bias SMEM reads out of the chunk loop. ----
    # (Leaving them inside re-issues ~121 scalar loads + splat setups per chunk;
    #  here they are loop-invariant traced scalars, cast once to the compute dtype.)
    w1s = [[w1_ref[k, c].astype(cdt) for c in range(C_MID)] for k in range(C_IN)]
    b1s = [b1_ref[c].astype(cdt) for c in range(C_MID)]
    w2s = [[w2_ref[k, c].astype(cdt) for c in range(C_MID)] for k in range(C_MID)]
    b2s = [b2_ref[c].astype(cdt) for c in range(C_MID)]
    w3s = [w3_ref[k].astype(cdt) for k in range(C_MID)]
    b3s = b3_ref[0].astype(cdt)

    def chunk(r0, rows):
        # Load the 4 input-channel planes for this chunk and cast once to the
        # compute dtype (bf16 packs [16,128] per vreg -> half the VALU ops).
        xs = [x_ref[k, pl.ds(r0, rows), :].astype(cdt) for k in range(C_IN)]

        # Streaming layers 1+2: compute h1[k], immediately fold it into all 8 h2
        # accumulators, then discard it (keeps peak live vregs low).
        h2 = [None] * C_MID
        for k in range(C_MID):
            acc = xs[0] * w1s[0][k]
            for j in range(1, C_IN):
                acc = acc + xs[j] * w1s[j][k]
            h1_k = jnp.maximum(acc + b1s[k], 0)
            for c in range(C_MID):
                t = h1_k * w2s[k][c]
                h2[c] = t if h2[c] is None else h2[c] + t

        # Layer-2 bias+ReLU fused with the layer-3 (8 -> 1) contraction.
        y = None
        for c in range(C_MID):
            h2c = jnp.maximum(h2[c] + b2s[c], 0)
            t = h2c * w3s[c]
            y = t if y is None else y + t
        y = y + b3s

        o_ref[pl.ds(r0, rows), :] = y.astype(o_ref.dtype)

    n_full = tile_r // inner
    tail = tile_r - n_full * inner

    if n_full == 1:
        chunk(0, inner)                                   # static offset, no loop
    elif n_full > 1:
        def body(ci, carry):
            chunk(pl.multiple_of(ci * inner, inner), inner)
            return carry
        lax.fori_loop(0, n_full, body, 0, unroll=2)
    if tail:
        chunk(n_full * inner, tail)                       # static ragged tile tail


def _pick_tile_r(r, n_batch, max_tile=1024, min_steps=4):
    """Rows (of 128 pixels) per grid step.

    Always returns either the full R axis (legal block for tiny inputs) or a
    multiple of 8, so the (8,128) block-shape rule is never violated.  The grid
    uses cdiv(R, tile_r); Pallas masks the ragged last block.  The tile is
    shrunk (halving) until there are at least `min_steps` total grid steps so
    the software pipeline and both v7x TensorCores have work to shard.
    """
    if r <= 8:
        return r
    tile = min(r, max_tile)
    tile = max(8, (tile // 8) * 8)
    while tile > 8 and n_batch * pl.cdiv(r, tile) < min_steps:
        tile = max(8, ((tile // 2) // 8) * 8)
    return tile


def mycnn_forward(x_nchw, params, *, compute_dtype=jnp.float32, max_tile=1024):
    """x_nchw: (N, 4, H, W) float32. Returns (N, 1, H, W) float32.

    compute_dtype=jnp.bfloat16 enables the packed-bf16 VALU path (~2x on
    bf16-native v6e/v7x); keep float32 for bit-accurate results.
    """
    w1, b1, w2, b2, w3, b3 = params
    N, C, H, W = x_nchw.shape
    assert C == C_IN, "MyCNN expects 4 input channels"
    HW = H * W
    R = pl.cdiv(HW, LANE)                      # pixel rows of 128 lanes
    pad = R * LANE - HW

    # NCHW is channel-major, so this reshape is free when HW % 128 == 0.
    x3 = x_nchw.reshape(N, C, HW)
    if pad:
        # NOTE: only taken for ragged HW; a pl.ANY + manual-DMA input path would
        # remove this extra HBM round trip (not needed for the shapes used here).
        x3 = jnp.pad(x3, ((0, 0), (0, 0), (0, pad)))
    x4 = x3.reshape(N, C, R, LANE)

    tile_r = _pick_tile_r(R, N, max_tile=max_tile)
    n_r = pl.cdiv(R, tile_r)
    inner = 32 if compute_dtype == jnp.bfloat16 else 16   # same vreg pressure
    inner = min(inner, tile_r)

    kernel = functools.partial(mycnn_kernel, inner=inner, compute_dtype=compute_dtype)

    pixels = N * HW
    cost = pl.CostEstimate(
        flops=2 * (C_IN * C_MID + C_MID * C_MID + C_MID * C_OUT) * pixels,
        transcendentals=0,
        bytes_accessed=(C_IN + C_OUT) * 4 * N * R * LANE + 544,
    )

    out = pl.pallas_call(
        kernel,
        out_shape=jax.ShapeDtypeStruct((N, R, LANE), jnp.float32),
        grid_spec=pltpu.PrefetchScalarGridSpec(
            num_scalar_prefetch=6,             # w1,b1,w2,b2,w3,b3 -> SMEM, fetched once
            grid=(N, n_r),
            in_specs=[
                pl.BlockSpec((None, C, tile_r, LANE),
                             lambda n, r, *prefetch: (n, 0, r, 0)),
            ],
            out_specs=pl.BlockSpec((None, tile_r, LANE),
                                   lambda n, r, *prefetch: (n, r, 0)),
        ),
        compiler_params=pltpu.CompilerParams(
            dimension_semantics=("parallel", "parallel")),
        cost_estimate=cost,
    )(w1, b1, w2, b2, w3, b3, x4)

    # (N, R, 128) -> drop pixel padding -> (N, 1, H, W)
    return out.reshape(N, 1, R * LANE)[:, :, :HW].reshape(N, 1, H, W)


def init_params(key):
    """Deterministic init mimicking PyTorch Conv2d defaults (uniform +-1/sqrt(fan_in)).
    PyTorch conv weights are (out_c, in_c, 1, 1); we store them as (in_c, out_c)."""
    ks = jax.random.split(key, 6)

    def conv_init(kw, kb, in_c, out_c):
        bound = 1.0 / (in_c ** 0.5)
        w = jax.random.uniform(kw, (in_c, out_c), jnp.float32, -bound, bound)
        b = jax.random.uniform(kb, (out_c,), jnp.float32, -bound, bound)
        return w, b

    w1, b1 = conv_init(ks[0], ks[1], 4, 8)
    w2, b2 = conv_init(ks[2], ks[3], 8, 8)
    w3, b3 = conv_init(ks[4], ks[5], 8, 1)
    return (w1, b1, w2, b2, w3.reshape(8), b3)


def mycnn_reference(x_nchw, params):
    """Pure-JAX reference of the 1x1-conv stack for verification."""
    w1, b1, w2, b2, w3, b3 = params
    N, C, H, W = x_nchw.shape
    x = jnp.transpose(x_nchw, (0, 2, 3, 1)).reshape(-1, C)
    h1 = jnp.maximum(x @ w1 + b1, 0.0)
    h2 = jnp.maximum(h1 @ w2 + b2, 0.0)
    y = h2 @ w3.reshape(-1, 1) + b3
    return jnp.transpose(y.reshape(N, H, W, 1), (0, 3, 1, 2))


if __name__ == "__main__":
    key = jax.random.PRNGKey(0)
    k_x, k_p = jax.random.split(key)

    # Small shapes consistent with the module: batch=2, channels=4, spatial=16
    x = jax.random.normal(k_x, (2, 4, 16, 16), jnp.float32)
    params = init_params(k_p)

    ref = mycnn_reference(x, params)

    # f32 path (default): bit-accurate vs the reference.
    out = jax.block_until_ready(mycnn_forward(x, params))
    assert out.shape == (2, 1, 16, 16)
    assert jnp.allclose(out, ref, atol=1e-5, rtol=1e-5)

    # Packed-bf16 VALU path (~2x on bf16-native v6e/v7x VPUs); looser tolerance.
    out_bf16 = jax.block_until_ready(
        mycnn_forward(x, params, compute_dtype=jnp.bfloat16))
    assert out_bf16.shape == (2, 1, 16, 16)
    assert jnp.allclose(out_bf16, ref, atol=2.5e-1, rtol=1e-1)

    print("KERNEL_OK")
</pallas_src>

<mosaic_0001>
module attributes {stable_mosaic.version = 11 : i64} {
  func.func @mycnn_kernel(%arg0: i32, %arg1: i32, %arg2: memref<4x8xf32, #tpu.memory_space<smem>>, %arg3: memref<8xf32, #tpu.memory_space<smem>>, %arg4: memref<8x8xf32, #tpu.memory_space<smem>>, %arg5: memref<8xf32, #tpu.memory_space<smem>>, %arg6: memref<8xf32, #tpu.memory_space<smem>>, %arg7: memref<1xf32, #tpu.memory_space<smem>>, %arg8: memref<1x4x2x128xf32, #tpu.memory_space<vmem>>, %arg9: memref<1x2x128xf32, #tpu.memory_space<vmem>>) attributes {dimension_semantics = [#tpu.dimension_semantics<parallel>, #tpu.dimension_semantics<parallel>], iteration_bounds = array<i64: 2, 1>, scalar_prefetch = 6 : i64, scratch_operands = 0 : i64, tpu.core_type = #tpu.core_type<tc>, window_params = [{transform_indices = @transform_0, window_bounds = array<i64: 1, 4, 2, 128>}, {transform_indices = @transform_1, window_bounds = array<i64: 1, 2, 128>}]} {
    %c0 = arith.constant 0 : index
    %c0_0 = arith.constant 0 : index
    %0 = memref.load %arg2[%c0, %c0_0] : memref<4x8xf32, #tpu.memory_space<smem>>
    %c0_1 = arith.constant 0 : index
    %c1 = arith.constant 1 : index
    %1 = memref.load %arg2[%c0_1, %c1] : memref<4x8xf32, #tpu.memory_space<smem>>
    %c0_2 = arith.constant 0 : index
    %c2 = arith.constant 2 : index
    %2 = memref.load %arg2[%c0_2, %c2] : memref<4x8xf32, #tpu.memory_space<smem>>
    %c0_3 = arith.constant 0 : index
    %c3 = arith.constant 3 : index
    %3 = memref.load %arg2[%c0_3, %c3] : memref<4x8xf32, #tpu.memory_space<smem>>
    %c0_4 = arith.constant 0 : index
    %c4 = arith.constant 4 : index
    %4 = memref.load %arg2[%c0_4, %c4] : memref<4x8xf32, #tpu.memory_space<smem>>
    %c0_5 = arith.constant 0 : index
    %c5 = arith.constant 5 : index
    %5 = memref.load %arg2[%c0_5, %c5] : memref<4x8xf32, #tpu.memory_space<smem>>
    %c0_6 = arith.constant 0 : index
    %c6 = arith.constant 6 : index
    %6 = memref.load %arg2[%c0_6, %c6] : memref<4x8xf32, #tpu.memory_space<smem>>
    %c0_7 = arith.constant 0 : index
    %c7 = arith.constant 7 : index
    %7 = memref.load %arg2[%c0_7, %c7] : memref<4x8xf32, #tpu.memory_space<smem>>
    %c1_8 = arith.constant 1 : index
    %c0_9 = arith.constant 0 : index
    %8 = memref.load %arg2[%c1_8, %c0_9] : memref<4x8xf32, #tpu.memory_space<smem>>
    %c1_10 = arith.constant 1 : index
    %c1_11 = arith.constant 1 : index
    %9 = memref.load %arg2[%c1_10, %c1_11] : memref<4x8xf32, #tpu.memory_space<smem>>
    %c1_12 = arith.constant 1 : index
    %c2_13 = arith.constant 2 : index
    %10 = memref.load %arg2[%c1_12, %c2_13] : memref<4x8xf32, #tpu.memory_space<smem>>
    %c1_14 = arith.constant 1 : index
    %c3_15 = arith.constant 3 : index
    %11 = memref.load %arg2[%c1_14, %c3_15] : memref<4x8xf32, #tpu.memory_space<smem>>
    %c1_16 = arith.constant 1 : index
    %c4_17 = arith.constant 4 : index
    %12 = memref.load %arg2[%c1_16, %c4_17] : memref<4x8xf32, #tpu.memory_space<smem>>
    %c1_18 = arith.constant 1 : index
    %c5_19 = arith.constant 5 : index
    %13 = memref.load %arg2[%c1_18, %c5_19] : memref<4x8xf32, #tpu.memory_space<smem>>
    %c1_20 = arith.constant 1 : index
    %c6_21 = arith.constant 6 : index
    %14 = memref.load %arg2[%c1_20, %c6_21] : memref<4x8xf32, #tpu.memory_space<smem>>
    %c1_22 = arith.constant 1 : index
    %c7_23 = arith.constant 7 : index
    %15 = memref.load %arg2[%c1_22, %c7_23] : memref<4x8xf32, #tpu.memory_space<smem>>
    %c2_24 = arith.constant 2 : index
    %c0_25 = arith.constant 0 : index
    %16 = memref.load %arg2[%c2_24, %c0_25] : memref<4x8xf32, #tpu.memory_space<smem>>
    %c2_26 = arith.constant 2 : index
    %c1_27 = arith.constant 1 : index
    %17 = memref.load %arg2[%c2_26, %c1_27] : memref<4x8xf32, #tpu.memory_space<smem>>
    %c2_28 = arith.constant 2 : index
    %c2_29 = arith.constant 2 : index
    %18 = memref.load %arg2[%c2_28, %c2_29] : memref<4x8xf32, #tpu.memory_space<smem>>
    %c2_30 = arith.constant 2 : index
    %c3_31 = arith.constant 3 : index
    %19 = memref.load %arg2[%c2_30, %c3_31] : memref<4x8xf32, #tpu.memory_space<smem>>
    %c2_32 = arith.constant 2 : index
    %c4_33 = arith.constant 4 : index
    %20 = memref.load %arg2[%c2_32, %c4_33] : memref<4x8xf32, #tpu.memory_space<smem>>
    %c2_34 = arith.constant 2 : index
    %c5_35 = arith.constant 5 : index
    %21 = memref.load %arg2[%c2_34, %c5_35] : memref<4x8xf32, #tpu.memory_space<smem>>
    %c2_36 = arith.constant 2 : index
    %c6_37 = arith.constant 6 : index
    %22 = memref.load %arg2[%c2_36, %c6_37] : memref<4x8xf32, #tpu.memory_space<smem>>
    %c2_38 = arith.constant 2 : index
    %c7_39 = arith.constant 7 : index
    %23 = memref.load %arg2[%c2_38, %c7_39] : memref<4x8xf32, #tpu.memory_space<smem>>
    %c3_40 = arith.constant 3 : index
    %c0_41 = arith.constant 0 : index
    %24 = memref.load %arg2[%c3_40, %c0_41] : memref<4x8xf32, #tpu.memory_space<smem>>
    %c3_42 = arith.constant 3 : index
    %c1_43 = arith.constant 1 : index
    %25 = memref.load %arg2[%c3_42, %c1_43] : memref<4x8xf32, #tpu.memory_space<smem>>
    %c3_44 = arith.constant 3 : index
    %c2_45 = arith.constant 2 : index
    %26 = memref.load %arg2[%c3_44, %c2_45] : memref<4x8xf32, #tpu.memory_space<smem>>
    %c3_46 = arith.constant 3 : index
    %c3_47 = arith.constant 3 : index
    %27 = memref.load %arg2[%c3_46, %c3_47] : memref<4x8xf32, #tpu.memory_space<smem>>
    %c3_48 = arith.constant 3 : index
    %c4_49 = arith.constant 4 : index
    %28 = memref.load %arg2[%c3_48, %c4_49] : memref<4x8xf32, #tpu.memory_space<smem>>
    %c3_50 = arith.constant 3 : index
    %c5_51 = arith.constant 5 : index
    %29 = memref.load %arg2[%c3_50, %c5_51] : memref<4x8xf32, #tpu.memory_space<smem>>
    %c3_52 = arith.constant 3 : index
    %c6_53 = arith.constant 6 : index
    %30 = memref.load %arg2[%c3_52, %c6_53] : memref<4x8xf32, #tpu.memory_space<smem>>
    %c3_54 = arith.constant 3 : index
    %c7_55 = arith.constant 7 : index
    %31 = memref.load %arg2[%c3_54, %c7_55] : memref<4x8xf32, #tpu.memory_space<smem>>
    %c0_56 = arith.constant 0 : index
    %32 = memref.load %arg3[%c0_56] : memref<8xf32, #tpu.memory_space<smem>>
    %c1_57 = arith.constant 1 : index
    %33 = memref.load %arg3[%c1_57] : memref<8xf32, #tpu.memory_space<smem>>
    %c2_58 = arith.constant 2 : index
    %34 = memref.load %arg3[%c2_58] : memref<8xf32, #tpu.memory_space<smem>>
    %c3_59 = arith.constant 3 : index
    %35 = memref.load %arg3[%c3_59] : memref<8xf32, #tpu.memory_space<smem>>
    %c4_60 = arith.constant 4 : index
    %36 = memref.load %arg3[%c4_60] : memref<8xf32, #tpu.memory_space<smem>>
    %c5_61 = arith.constant 5 : index
    %37 = memref.load %arg3[%c5_61] : memref<8xf32, #tpu.memory_space<smem>>
    %c6_62 = arith.constant 6 : index
    %38 = memref.load %arg3[%c6_62] : memref<8xf32, #tpu.memory_space<smem>>
    %c7_63 = arith.constant 7 : index
    %39 = memref.load %arg3[%c7_63] : memref<8xf32, #tpu.memory_space<smem>>
    %c0_64 = arith.constant 0 : index
    %c0_65 = arith.constant 0 : index
    %40 = memref.load %arg4[%c0_64, %c0_65] : memref<8x8xf32, #tpu.memory_space<smem>>
    %c0_66 = arith.constant 0 : index
    %c1_67 = arith.constant 1 : index
    %41 = memref.load %arg4[%c0_66, %c1_67] : memref<8x8xf32, #tpu.memory_space<smem>>
    %c0_68 = arith.constant 0 : index
    %c2_69 = arith.constant 2 : index
    %42 = memref.load %arg4[%c0_68, %c2_69] : memref<8x8xf32, #tpu.memory_space<smem>>
    %c0_70 = arith.constant 0 : index
    %c3_71 = arith.constant 3 : index
    %43 = memref.load %arg4[%c0_70, %c3_71] : memref<8x8xf32, #tpu.memory_space<smem>>
    %c0_72 = arith.constant 0 : index
    %c4_73 = arith.constant 4 : index
    %44 = memref.load %arg4[%c0_72, %c4_73] : memref<8x8xf32, #tpu.memory_space<smem>>
    %c0_74 = arith.constant 0 : index
    %c5_75 = arith.constant 5 : index
    %45 = memref.load %arg4[%c0_74, %c5_75] : memref<8x8xf32, #tpu.memory_space<smem>>
    %c0_76 = arith.constant 0 : index
    %c6_77 = arith.constant 6 : index
    %46 = memref.load %arg4[%c0_76, %c6_77] : memref<8x8xf32, #tpu.memory_space<smem>>
    %c0_78 = arith.constant 0 : index
    %c7_79 = arith.constant 7 : index
    %47 = memref.load %arg4[%c0_78, %c7_79] : memref<8x8xf32, #tpu.memory_space<smem>>
    %c1_80 = arith.constant 1 : index
    %c0_81 = arith.constant 0 : index
    %48 = memref.load %arg4[%c1_80, %c0_81] : memref<8x8xf32, #tpu.memory_space<smem>>
    %c1_82 = arith.constant 1 : index
    %c1_83 = arith.constant 1 : index
    %49 = memref.load %arg4[%c1_82, %c1_83] : memref<8x8xf32, #tpu.memory_space<smem>>
    %c1_84 = arith.constant 1 : index
    %c2_85 = arith.constant 2 : index
    %50 = memref.load %arg4[%c1_84, %c2_85] : memref<8x8xf32, #tpu.memory_space<smem>>
    %c1_86 = arith.constant 1 : index
    %c3_87 = arith.constant 3 : index
    %51 = memref.load %arg4[%c1_86, %c3_87] : memref<8x8xf32, #tpu.memory_space<smem>>
    %c1_88 = arith.constant 1 : index
    %c4_89 = arith.constant 4 : index
    %52 = memref.load %arg4[%c1_88, %c4_89] : memref<8x8xf32, #tpu.memory_space<smem>>
    %c1_90 = arith.constant 1 : index
    %c5_91 = arith.constant 5 : index
    %53 = memref.load %arg4[%c1_90, %c5_91] : memref<8x8xf32, #tpu.memory_space<smem>>
    %c1_92 = arith.constant 1 : index
    %c6_93 = arith.constant 6 : index
    %54 = memref.load %arg4[%c1_92, %c6_93] : memref<8x8xf32, #tpu.memory_space<smem>>
    %c1_94 = arith.constant 1 : index
    %c7_95 = arith.constant 7 : index
    %55 = memref.load %arg4[%c1_94, %c7_95] : memref<8x8xf32, #tpu.memory_space<smem>>
    %c2_96 = arith.constant 2 : index
    %c0_97 = arith.constant 0 : index
    %56 = memref.load %arg4[%c2_96, %c0_97] : memref<8x8xf32, #tpu.memory_space<smem>>
    %c2_98 = arith.constant 2 : index
    %c1_99 = arith.constant 1 : index
    %57 = memref.load %arg4[%c2_98, %c1_99] : memref<8x8xf32, #tpu.memory_space<smem>>
    %c2_100 = arith.constant 2 : index
    %c2_101 = arith.constant 2 : index
    %58 = memref.load %arg4[%c2_100, %c2_101] : memref<8x8xf32, #tpu.memory_space<smem>>
    %c2_102 = arith.constant 2 : index
    %c3_103 = arith.constant 3 : index
    %59 = memref.load %arg4[%c2_102, %c3_103] : memref<8x8xf32, #tpu.memory_space<smem>>
    %c2_104 = arith.constant 2 : index
    %c4_105 = arith.constant 4 : index
    %60 = memref.load %arg4[%c2_104, %c4_105] : memref<8x8xf32, #tpu.memory_space<smem>>
    %c2_106 = arith.constant 2 : index
    %c5_107 = arith.constant 5 : index
    %61 = memref.load %arg4[%c2_106, %c5_107] : memref<8x8xf32, #tpu.memory_space<smem>>
    %c2_108 = arith.constant 2 : index
    %c6_109 = arith.constant 6 : index
    %62 = memref.load %arg4[%c2_108, %c6_109] : memref<8x8xf32, #tpu.memory_space<smem>>
    %c2_110 = arith.constant 2 : index
    %c7_111 = arith.constant 7 : index
    %63 = memref.load %arg4[%c2_110, %c7_111] : memref<8x8xf32, #tpu.memory_space<smem>>
    %c3_112 = arith.constant 3 : index
    %c0_113 = arith.constant 0 : index
    %64 = memref.load %arg4[%c3_112, %c0_113] : memref<8x8xf32, #tpu.memory_space<smem>>
    %c3_114 = arith.constant 3 : index
    %c1_115 = arith.constant 1 : index
    %65 = memref.load %arg4[%c3_114, %c1_115] : memref<8x8xf32, #tpu.memory_space<smem>>
    %c3_116 = arith.constant 3 : index
    %c2_117 = arith.constant 2 : index
    %66 = memref.load %arg4[%c3_116, %c2_117] : memref<8x8xf32, #tpu.memory_space<smem>>
    %c3_118 = arith.constant 3 : index
    %c3_119 = arith.constant 3 : index
    %67 = memref.load %arg4[%c3_118, %c3_119] : memref<8x8xf32, #tpu.memory_space<smem>>
    %c3_120 = arith.constant 3 : index
    %c4_121 = arith.constant 4 : index
    %68 = memref.load %arg4[%c3_120, %c4_121] : memref<8x8xf32, #tpu.memory_space<smem>>
    %c3_122 = arith.constant 3 : index
    %c5_123 = arith.constant 5 : index
    %69 = memref.load %arg4[%c3_122, %c5_123] : memref<8x8xf32, #tpu.memory_space<smem>>
    %c3_124 = arith.constant 3 : index
    %c6_125 = arith.constant 6 : index
    %70 = memref.load %arg4[%c3_124, %c6_125] : memref<8x8xf32, #tpu.memory_space<smem>>
    %c3_126 = arith.constant 3 : index
    %c7_127 = arith.constant 7 : index
    %71 = memref.load %arg4[%c3_126, %c7_127] : memref<8x8xf32, #tpu.memory_space<smem>>
    %c4_128 = arith.constant 4 : index
    %c0_129 = arith.constant 0 : index
    %72 = memref.load %arg4[%c4_128, %c0_129] : memref<8x8xf32, #tpu.memory_space<smem>>
    %c4_130 = arith.constant 4 : index
    %c1_131 = arith.constant 1 : index
    %73 = memref.load %arg4[%c4_130, %c1_131] : memref<8x8xf32, #tpu.memory_space<smem>>
    %c4_132 = arith.constant 4 : index
    %c2_133 = arith.constant 2 : index
    %74 = memref.load %arg4[%c4_132, %c2_133] : memref<8x8xf32, #tpu.memory_space<smem>>
    %c4_134 = arith.constant 4 : index
    %c3_135 = arith.constant 3 : index
    %75 = memref.load %arg4[%c4_134, %c3_135] : memref<8x8xf32, #tpu.memory_space<smem>>
    %c4_136 = arith.constant 4 : index
    %c4_137 = arith.constant 4 : index
    %76 = memref.load %arg4[%c4_136, %c4_137] : memref<8x8xf32, #tpu.memory_space<smem>>
    %c4_138 = arith.constant 4 : index
    %c5_139 = arith.constant 5 : index
    %77 = memref.load %arg4[%c4_138, %c5_139] : memref<8x8xf32, #tpu.memory_space<smem>>
    %c4_140 = arith.constant 4 : index
    %c6_141 = arith.constant 6 : index
    %78 = memref.load %arg4[%c4_140, %c6_141] : memref<8x8xf32, #tpu.memory_space<smem>>
    %c4_142 = arith.constant 4 : index
    %c7_143 = arith.constant 7 : index
    %79 = memref.load %arg4[%c4_142, %c7_143] : memref<8x8xf32, #tpu.memory_space<smem>>
    %c5_144 = arith.constant 5 : index
    %c0_145 = arith.constant 0 : index
    %80 = memref.load %arg4[%c5_144, %c0_145] : memref<8x8xf32, #tpu.memory_space<smem>>
    %c5_146 = arith.constant 5 : index
    %c1_147 = arith.constant 1 : index
    %81 = memref.load %arg4[%c5_146, %c1_147] : memref<8x8xf32, #tpu.memory_space<smem>>
    %c5_148 = arith.constant 5 : index
    %c2_149 = arith.constant 2 : index
    %82 = memref.load %arg4[%c5_148, %c2_149] : memref<8x8xf32, #tpu.memory_space<smem>>
    %c5_150 = arith.constant 5 : index
    %c3_151 = arith.constant 3 : index
    %83 = memref.load %arg4[%c5_150, %c3_151] : memref<8x8xf32, #tpu.memory_space<smem>>
    %c5_152 = arith.constant 5 : index
    %c4_153 = arith.constant 4 : index
    %84 = memref.load %arg4[%c5_152, %c4_153] : memref<8x8xf32, #tpu.memory_space<smem>>
    %c5_154 = arith.constant 5 : index
    %c5_155 = arith.constant 5 : index
    %85 = memref.load %arg4[%c5_154, %c5_155] : memref<8x8xf32, #tpu.memory_space<smem>>
    %c5_156 = arith.constant 5 : index
    %c6_157 = arith.constant 6 : index
    %86 = memref.load %arg4[%c5_156, %c6_157] : memref<8x8xf32, #tpu.memory_space<smem>>
    %c5_158 = arith.constant 5 : index
    %c7_159 = arith.constant 7 : index
    %87 = memref.load %arg4[%c5_158, %c7_159] : memref<8x8xf32, #tpu.memory_space<smem>>
    %c6_160 = arith.constant 6 : index
    %c0_161 = arith.constant 0 : index
    %88 = memref.load %arg4[%c6_160, %c0_161] : memref<8x8xf32, #tpu.memory_space<smem>>
    %c6_162 = arith.constant 6 : index
    %c1_163 = arith.constant 1 : index
    %89 = memref.load %arg4[%c6_162, %c1_163] : memref<8x8xf32, #tpu.memory_space<smem>>
    %c6_164 = arith.constant 6 : index
    %c2_165 = arith.constant 2 : index
    %90 = memref.load %arg4[%c6_164, %c2_165] : memref<8x8xf32, #tpu.memory_space<smem>>
    %c6_166 = arith.constant 6 : index
    %c3_167 = arith.constant 3 : index
    %91 = memref.load %arg4[%c6_166, %c3_167] : memref<8x8xf32, #tpu.memory_space<smem>>
    %c6_168 = arith.constant 6 : index
    %c4_169 = arith.constant 4 : index
    %92 = memref.load %arg4[%c6_168, %c4_169] : memref<8x8xf32, #tpu.memory_space<smem>>
    %c6_170 = arith.constant 6 : index
    %c5_171 = arith.constant 5 : index
    %93 = memref.load %arg4[%c6_170, %c5_171] : memref<8x8xf32, #tpu.memory_space<smem>>
    %c6_172 = arith.constant 6 : index
    %c6_173 = arith.constant 6 : index
    %94 = memref.load %arg4[%c6_172, %c6_173] : memref<8x8xf32, #tpu.memory_space<smem>>
    %c6_174 = arith.constant 6 : index
    %c7_175 = arith.constant 7 : index
    %95 = memref.load %arg4[%c6_174, %c7_175] : memref<8x8xf32, #tpu.memory_space<smem>>
    %c7_176 = arith.constant 7 : index
    %c0_177 = arith.constant 0 : index
    %96 = memref.load %arg4[%c7_176, %c0_177] : memref<8x8xf32, #tpu.memory_space<smem>>
    %c7_178 = arith.constant 7 : index
    %c1_179 = arith.constant 1 : index
    %97 = memref.load %arg4[%c7_178, %c1_179] : memref<8x8xf32, #tpu.memory_space<smem>>
    %c7_180 = arith.constant 7 : index
    %c2_181 = arith.constant 2 : index
    %98 = memref.load %arg4[%c7_180, %c2_181] : memref<8x8xf32, #tpu.memory_space<smem>>
    %c7_182 = arith.constant 7 : index
    %c3_183 = arith.constant 3 : index
    %99 = memref.load %arg4[%c7_182, %c3_183] : memref<8x8xf32, #tpu.memory_space<smem>>
    %c7_184 = arith.constant 7 : index
    %c4_185 = arith.constant 4 : index
    %100 = memref.load %arg4[%c7_184, %c4_185] : memref<8x8xf32, #tpu.memory_space<smem>>
    %c7_186 = arith.constant 7 : index
    %c5_187 = arith.constant 5 : index
    %101 = memref.load %arg4[%c7_186, %c5_187] : memref<8x8xf32, #tpu.memory_space<smem>>
    %c7_188 = arith.constant 7 : index
    %c6_189 = arith.constant 6 : index
    %102 = memref.load %arg4[%c7_188, %c6_189] : memref<8x8xf32, #tpu.memory_space<smem>>
    %c7_190 = arith.constant 7 : index
    %c7_191 = arith.constant 7 : index
    %103 = memref.load %arg4[%c7_190, %c7_191] : memref<8x8xf32, #tpu.memory_space<smem>>
    %c0_192 = arith.constant 0 : index
    %104 = memref.load %arg5[%c0_192] : memref<8xf32, #tpu.memory_space<smem>>
    %c1_193 = arith.constant 1 : index
    %105 = memref.load %arg5[%c1_193] : memref<8xf32, #tpu.memory_space<smem>>
    %c2_194 = arith.constant 2 : index
    %106 = memref.load %arg5[%c2_194] : memref<8xf32, #tpu.memory_space<smem>>
    %c3_195 = arith.constant 3 : index
    %107 = memref.load %arg5[%c3_195] : memref<8xf32, #tpu.memory_space<smem>>
    %c4_196 = arith.constant 4 : index
    %108 = memref.load %arg5[%c4_196] : memref<8xf32, #tpu.memory_space<smem>>
    %c5_197 = arith.constant 5 : index
    %109 = memref.load %arg5[%c5_197] : memref<8xf32, #tpu.memory_space<smem>>
    %c6_198 = arith.constant 6 : index
    %110 = memref.load %arg5[%c6_198] : memref<8xf32, #tpu.memory_space<smem>>
    %c7_199 = arith.constant 7 : index
    %111 = memref.load %arg5[%c7_199] : memref<8xf32, #tpu.memory_space<smem>>
    %c0_200 = arith.constant 0 : index
    %112 = memref.load %arg6[%c0_200] : memref<8xf32, #tpu.memory_space<smem>>
    %c1_201 = arith.constant 1 : index
    %113 = memref.load %arg6[%c1_201] : memref<8xf32, #tpu.memory_space<smem>>
    %c2_202 = arith.constant 2 : index
    %114 = memref.load %arg6[%c2_202] : memref<8xf32, #tpu.memory_space<smem>>
    %c3_203 = arith.constant 3 : index
    %115 = memref.load %arg6[%c3_203] : memref<8xf32, #tpu.memory_space<smem>>
    %c4_204 = arith.constant 4 : index
    %116 = memref.load %arg6[%c4_204] : memref<8xf32, #tpu.memory_space<smem>>
    %c5_205 = arith.constant 5 : index
    %117 = memref.load %arg6[%c5_205] : memref<8xf32, #tpu.memory_space<smem>>
    %c6_206 = arith.constant 6 : index
    %118 = memref.load %arg6[%c6_206] : memref<8xf32, #tpu.memory_space<smem>>
    %c7_207 = arith.constant 7 : index
    %119 = memref.load %arg6[%c7_207] : memref<8xf32, #tpu.memory_space<smem>>
    %c0_208 = arith.constant 0 : index
    %120 = memref.load %arg7[%c0_208] : memref<1xf32, #tpu.memory_space<smem>>
    %c0_209 = arith.constant 0 : index
    %c0_210 = arith.constant 0 : index
    %c0_211 = arith.constant 0 : index
    %c0_212 = arith.constant 0 : index
    %121 = vector.load %arg8[%c0_209, %c0_210, %c0_211, %c0_212] : memref<1x4x2x128xf32, #tpu.memory_space<vmem>>, vector<1x1x2x128xf32>
    %122 = vector.shape_cast %121 : vector<1x1x2x128xf32> to vector<2x128xf32>
    %c0_213 = arith.constant 0 : index
    %c1_214 = arith.constant 1 : index
    %c0_215 = arith.constant 0 : index
    %c0_216 = arith.constant 0 : index
    %123 = vector.load %arg8[%c0_213, %c1_214, %c0_215, %c0_216] : memref<1x4x2x128xf32, #tpu.memory_space<vmem>>, vector<1x1x2x128xf32>
    %124 = vector.shape_cast %123 : vector<1x1x2x128xf32> to vector<2x128xf32>
    %c0_217 = arith.constant 0 : index
    %c2_218 = arith.constant 2 : index
    %c0_219 = arith.constant 0 : index
    %c0_220 = arith.constant 0 : index
    %125 = vector.load %arg8[%c0_217, %c2_218, %c0_219, %c0_220] : memref<1x4x2x128xf32, #tpu.memory_space<vmem>>, vector<1x1x2x128xf32>
    %126 = vector.shape_cast %125 : vector<1x1x2x128xf32> to vector<2x128xf32>
    %c0_221 = arith.constant 0 : index
    %c3_222 = arith.constant 3 : index
    %c0_223 = arith.constant 0 : index
    %c0_224 = arith.constant 0 : index
    %127 = vector.load %arg8[%c0_221, %c3_222, %c0_223, %c0_224] : memref<1x4x2x128xf32, #tpu.memory_space<vmem>>, vector<1x1x2x128xf32>
    %128 = vector.shape_cast %127 : vector<1x1x2x128xf32> to vector<2x128xf32>
    %129 = vector.broadcast %0 : f32 to vector<2x128xf32>
    %130 = arith.mulf %122, %129 : vector<2x128xf32>
    %131 = vector.broadcast %8 : f32 to vector<2x128xf32>
    %132 = arith.mulf %124, %131 : vector<2x128xf32>
    %133 = arith.addf %130, %132 : vector<2x128xf32>
    %134 = vector.broadcast %16 : f32 to vector<2x128xf32>
    %135 = arith.mulf %126, %134 : vector<2x128xf32>
    %136 = arith.addf %133, %135 : vector<2x128xf32>
    %137 = vector.broadcast %24 : f32 to vector<2x128xf32>
    %138 = arith.mulf %128, %137 : vector<2x128xf32>
    %139 = arith.addf %136, %138 : vector<2x128xf32>
    %140 = vector.broadcast %32 : f32 to vector<2x128xf32>
    %141 = arith.addf %139, %140 : vector<2x128xf32>
    %cst = arith.constant 0.000000e+00 : f32
    %142 = vector.broadcast %cst : f32 to vector<2x128xf32>
    %143 = arith.maximumf %141, %142 : vector<2x128xf32>
    %144 = vector.broadcast %40 : f32 to vector<2x128xf32>
    %145 = arith.mulf %143, %144 : vector<2x128xf32>
    %146 = vector.broadcast %41 : f32 to vector<2x128xf32>
    %147 = arith.mulf %143, %146 : vector<2x128xf32>
    %148 = vector.broadcast %42 : f32 to vector<2x128xf32>
    %149 = arith.mulf %143, %148 : vector<2x128xf32>
    %150 = vector.broadcast %43 : f32 to vector<2x128xf32>
    %151 = arith.mulf %143, %150 : vector<2x128xf32>
    %152 = vector.broadcast %44 : f32 to vector<2x128xf32>
    %153 = arith.mulf %143, %152 : vector<2x128xf32>
    %154 = vector.broadcast %45 : f32 to vector<2x128xf32>
    %155 = arith.mulf %143, %154 : vector<2x128xf32>
    %156 = vector.broadcast %46 : f32 to vector<2x128xf32>
    %157 = arith.mulf %143, %156 : vector<2x128xf32>
    %158 = vector.broadcast %47 : f32 to vector<2x128xf32>
    %159 = arith.mulf %143, %158 : vector<2x128xf32>
    %160 = vector.broadcast %1 : f32 to vector<2x128xf32>
    %161 = arith.mulf %122, %160 : vector<2x128xf32>
    %162 = vector.broadcast %9 : f32 to vector<2x128xf32>
    %163 = arith.mulf %124, %162 : vector<2x128xf32>
    %164 = arith.addf %161, %163 : vector<2x128xf32>
    %165 = vector.broadcast %17 : f32 to vector<2x128xf32>
    %166 = arith.mulf %126, %165 : vector<2x128xf32>
    %167 = arith.addf %164, %166 : vector<2x128xf32>
    %168 = vector.broadcast %25 : f32 to vector<2x128xf32>
    %169 = arith.mulf %128, %168 : vector<2x128xf32>
    %170 = arith.addf %167, %169 : vector<2x128xf32>
    %171 = vector.broadcast %33 : f32 to vector<2x128xf32>
    %172 = arith.addf %170, %171 : vector<2x128xf32>
    %cst_225 = arith.constant 0.000000e+00 : f32
    %173 = vector.broadcast %cst_225 : f32 to vector<2x128xf32>
    %174 = arith.maximumf %172, %173 : vector<2x128xf32>
    %175 = vector.broadcast %48 : f32 to vector<2x128xf32>
    %176 = arith.mulf %174, %175 : vector<2x128xf32>
    %177 = arith.addf %145, %176 : vector<2x128xf32>
    %178 = vector.broadcast %49 : f32 to vector<2x128xf32>
    %179 = arith.mulf %174, %178 : vector<2x128xf32>
    %180 = arith.addf %147, %179 : vector<2x128xf32>
    %181 = vector.broadcast %50 : f32 to vector<2x128xf32>
    %182 = arith.mulf %174, %181 : vector<2x128xf32>
    %183 = arith.addf %149, %182 : vector<2x128xf32>
    %184 = vector.broadcast %51 : f32 to vector<2x128xf32>
    %185 = arith.mulf %174, %184 : vector<2x128xf32>
    %186 = arith.addf %151, %185 : vector<2x128xf32>
    %187 = vector.broadcast %52 : f32 to vector<2x128xf32>
    %188 = arith.mulf %174, %187 : vector<2x128xf32>
    %189 = arith.addf %153, %188 : vector<2x128xf32>
    %190 = vector.broadcast %53 : f32 to vector<2x128xf32>
    %191 = arith.mulf %174, %190 : vector<2x128xf32>
    %192 = arith.addf %155, %191 : vector<2x128xf32>
    %193 = vector.broadcast %54 : f32 to vector<2x128xf32>
    %194 = arith.mulf %174, %193 : vector<2x128xf32>
    %195 = arith.addf %157, %194 : vector<2x128xf32>
    %196 = vector.broadcast %55 : f32 to vector<2x128xf32>
    %197 = arith.mulf %174, %196 : vector<2x128xf32>
    %198 = arith.addf %159, %197 : vector<2x128xf32>
    %199 = vector.broadcast %2 : f32 to vector<2x128xf32>
    %200 = arith.mulf %122, %199 : vector<2x128xf32>
    %201 = vector.broadcast %10 : f32 to vector<2x128xf32>
    %202 = arith.mulf %124, %201 : vector<2x128xf32>
    %203 = arith.addf %200, %202 : vector<2x128xf32>
    %204 = vector.broadcast %18 : f32 to vector<2x128xf32>
    %205 = arith.mulf %126, %204 : vector<2x128xf32>
    %206 = arith.addf %203, %205 : vector<2x128xf32>
    %207 = vector.broadcast %26 : f32 to vector<2x128xf32>
    %208 = arith.mulf %128, %207 : vector<2x128xf32>
    %209 = arith.addf %206, %208 : vector<2x128xf32>
    %210 = vector.broadcast %34 : f32 to vector<2x128xf32>
    %211 = arith.addf %209, %210 : vector<2x128xf32>
    %cst_226 = arith.constant 0.000000e+00 : f32
    %212 = vector.broadcast %cst_226 : f32 to vector<2x128xf32>
    %213 = arith.maximumf %211, %212 : vector<2x128xf32>
    %214 = vector.broadcast %56 : f32 to vector<2x128xf32>
    %215 = arith.mulf %213, %214 : vector<2x128xf32>
    %216 = arith.addf %177, %215 : vector<2x128xf32>
    %217 = vector.broadcast %57 : f32 to vector<2x128xf32>
    %218 = arith.mulf %213, %217 : vector<2x128xf32>
    %219 = arith.addf %180, %218 : vector<2x128xf32>
    %220 = vector.broadcast %58 : f32 to vector<2x128xf32>
    %221 = arith.mulf %213, %220 : vector<2x128xf32>
    %222 = arith.addf %183, %221 : vector<2x128xf32>
    %223 = vector.broadcast %59 : f32 to vector<2x128xf32>
    %224 = arith.mulf %213, %223 : vector<2x128xf32>
    %225 = arith.addf %186, %224 : vector<2x128xf32>
    %226 = vector.broadcast %60 : f32 to vector<2x128xf32>
    %227 = arith.mulf %213, %226 : vector<2x128xf32>
    %228 = arith.addf %189, %227 : vector<2x128xf32>
    %229 = vector.broadcast %61 : f32 to vector<2x128xf32>
    %230 = arith.mulf %213, %229 : vector<2x128xf32>
    %231 = arith.addf %192, %230 : vector<2x128xf32>
    %232 = vector.broadcast %62 : f32 to vector<2x128xf32>
    %233 = arith.mulf %213, %232 : vector<2x128xf32>
    %234 = arith.addf %195, %233 : vector<2x128xf32>
    %235 = vector.broadcast %63 : f32 to vector<2x128xf32>
    %236 = arith.mulf %213, %235 : vector<2x128xf32>
    %237 = arith.addf %198, %236 : vector<2x128xf32>
    %238 = vector.broadcast %3 : f32 to vector<2x128xf32>
    %239 = arith.mulf %122, %238 : vector<2x128xf32>
    %240 = vector.broadcast %11 : f32 to vector<2x128xf32>
    %241 = arith.mulf %124, %240 : vector<2x128xf32>
    %242 = arith.addf %239, %241 : vector<2x128xf32>
    %243 = vector.broadcast %19 : f32 to vector<2x128xf32>
    %244 = arith.mulf %126, %243 : vector<2x128xf32>
    %245 = arith.addf %242, %244 : vector<2x128xf32>
    %246 = vector.broadcast %27 : f32 to vector<2x128xf32>
    %247 = arith.mulf %128, %246 : vector<2x128xf32>
    %248 = arith.addf %245, %247 : vector<2x128xf32>
    %249 = vector.broadcast %35 : f32 to vector<2x128xf32>
    %250 = arith.addf %248, %249 : vector<2x128xf32>
    %cst_227 = arith.constant 0.000000e+00 : f32
    %251 = vector.broadcast %cst_227 : f32 to vector<2x128xf32>
    %252 = arith.maximumf %250, %251 : vector<2x128xf32>
    %253 = vector.broadcast %64 : f32 to vector<2x128xf32>
    %254 = arith.mulf %252, %253 : vector<2x128xf32>
    %255 = arith.addf %216, %254 : vector<2x128xf32>
    %256 = vector.broadcast %65 : f32 to vector<2x128xf32>
    %257 = arith.mulf %252, %256 : vector<2x128xf32>
    %258 = arith.addf %219, %257 : vector<2x128xf32>
    %259 = vector.broadcast %66 : f32 to vector<2x128xf32>
    %260 = arith.mulf %252, %259 : vector<2x128xf32>
    %261 = arith.addf %222, %260 : vector<2x128xf32>
    %262 = vector.broadcast %67 : f32 to vector<2x128xf32>
    %263 = arith.mulf %252, %262 : vector<2x128xf32>
    %264 = arith.addf %225, %263 : vector<2x128xf32>
    %265 = vector.broadcast %68 : f32 to vector<2x128xf32>
    %266 = arith.mulf %252, %265 : vector<2x128xf32>
    %267 = arith.addf %228, %266 : vector<2x128xf32>
    %268 = vector.broadcast %69 : f32 to vector<2x128xf32>
    %269 = arith.mulf %252, %268 : vector<2x128xf32>
    %270 = arith.addf %231, %269 : vector<2x128xf32>
    %271 = vector.broadcast %70 : f32 to vector<2x128xf32>
    %272 = arith.mulf %252, %271 : vector<2x128xf32>
    %273 = arith.addf %234, %272 : vector<2x128xf32>
    %274 = vector.broadcast %71 : f32 to vector<2x128xf32>
    %275 = arith.mulf %252, %274 : vector<2x128xf32>
    %276 = arith.addf %237, %275 : vector<2x128xf32>
    %277 = vector.broadcast %4 : f32 to vector<2x128xf32>
    %278 = arith.mulf %122, %277 : vector<2x128xf32>
    %279 = vector.broadcast %12 : f32 to vector<2x128xf32>
    %280 = arith.mulf %124, %279 : vector<2x128xf32>
    %281 = arith.addf %278, %280 : vector<2x128xf32>
    %282 = vector.broadcast %20 : f32 to vector<2x128xf32>
    %283 = arith.mulf %126, %282 : vector<2x128xf32>
    %284 = arith.addf %281, %283 : vector<2x128xf32>
    %285 = vector.broadcast %28 : f32 to vector<2x128xf32>
    %286 = arith.mulf %128, %285 : vector<2x128xf32>
    %287 = arith.addf %284, %286 : vector<2x128xf32>
    %288 = vector.broadcast %36 : f32 to vector<2x128xf32>
    %289 = arith.addf %287, %288 : vector<2x128xf32>
    %cst_228 = arith.constant 0.000000e+00 : f32
    %290 = vector.broadcast %cst_228 : f32 to vector<2x128xf32>
    %291 = arith.maximumf %289, %290 : vector<2x128xf32>
    %292 = vector.broadcast %72 : f32 to vector<2x128xf32>
    %293 = arith.mulf %291, %292 : vector<2x128xf32>
    %294 = arith.addf %255, %293 : vector<2x128xf32>
    %295 = vector.broadcast %73 : f32 to vector<2x128xf32>
    %296 = arith.mulf %291, %295 : vector<2x128xf32>
    %297 = arith.addf %258, %296 : vector<2x128xf32>
    %298 = vector.broadcast %74 : f32 to vector<2x128xf32>
    %299 = arith.mulf %291, %298 : vector<2x128xf32>
    %300 = arith.addf %261, %299 : vector<2x128xf32>
    %301 = vector.broadcast %75 : f32 to vector<2x128xf32>
    %302 = arith.mulf %291, %301 : vector<2x128xf32>
    %303 = arith.addf %264, %302 : vector<2x128xf32>
    %304 = vector.broadcast %76 : f32 to vector<2x128xf32>
    %305 = arith.mulf %291, %304 : vector<2x128xf32>
    %306 = arith.addf %267, %305 : vector<2x128xf32>
    %307 = vector.broadcast %77 : f32 to vector<2x128xf32>
    %308 = arith.mulf %291, %307 : vector<2x128xf32>
    %309 = arith.addf %270, %308 : vector<2x128xf32>
    %310 = vector.broadcast %78 : f32 to vector<2x128xf32>
    %311 = arith.mulf %291, %310 : vector<2x128xf32>
    %312 = arith.addf %273, %311 : vector<2x128xf32>
    %313 = vector.broadcast %79 : f32 to vector<2x128xf32>
    %314 = arith.mulf %291, %313 : vector<2x128xf32>
    %315 = arith.addf %276, %314 : vector<2x128xf32>
    %316 = vector.broadcast %5 : f32 to vector<2x128xf32>
    %317 = arith.mulf %122, %316 : vector<2x128xf32>
    %318 = vector.broadcast %13 : f32 to vector<2x128xf32>
    %319 = arith.mulf %124, %318 : vector<2x128xf32>
    %320 = arith.addf %317, %319 : vector<2x128xf32>
    %321 = vector.broadcast %21 : f32 to vector<2x128xf32>
    %322 = arith.mulf %126, %321 : vector<2x128xf32>
    %323 = arith.addf %320, %322 : vector<2x128xf32>
    %324 = vector.broadcast %29 : f32 to vector<2x128xf32>
    %325 = arith.mulf %128, %324 : vector<2x128xf32>
    %326 = arith.addf %323, %325 : vector<2x128xf32>
    %327 = vector.broadcast %37 : f32 to vector<2x128xf32>
    %328 = arith.addf %326, %327 : vector<2x128xf32>
    %cst_229 = arith.constant 0.000000e+00 : f32
    %329 = vector.broadcast %cst_229 : f32 to vector<2x128xf32>
    %330 = arith.maximumf %328, %329 : vector<2x128xf32>
    %331 = vector.broadcast %80 : f32 to vector<2x128xf32>
    %332 = arith.mulf %330, %331 : vector<2x128xf32>
    %333 = arith.addf %294, %332 : vector<2x128xf32>
    %334 = vector.broadcast %81 : f32 to vector<2x128xf32>
    %335 = arith.mulf %330, %334 : vector<2x128xf32>
    %336 = arith.addf %297, %335 : vector<2x128xf32>
    %337 = vector.broadcast %82 : f32 to vector<2x128xf32>
    %338 = arith.mulf %330, %337 : vector<2x128xf32>
    %339 = arith.addf %300, %338 : vector<2x128xf32>
    %340 = vector.broadcast %83 : f32 to vector<2x128xf32>
    %341 = arith.mulf %330, %340 : vector<2x128xf32>
    %342 = arith.addf %303, %341 : vector<2x128xf32>
    %343 = vector.broadcast %84 : f32 to vector<2x128xf32>
    %344 = arith.mulf %330, %343 : vector<2x128xf32>
    %345 = arith.addf %306, %344 : vector<2x128xf32>
    %346 = vector.broadcast %85 : f32 to vector<2x128xf32>
    %347 = arith.mulf %330, %346 : vector<2x128xf32>
    %348 = arith.addf %309, %347 : vector<2x128xf32>
    %349 = vector.broadcast %86 : f32 to vector<2x128xf32>
    %350 = arith.mulf %330, %349 : vector<2x128xf32>
    %351 = arith.addf %312, %350 : vector<2x128xf32>
    %352 = vector.broadcast %87 : f32 to vector<2x128xf32>
    %353 = arith.mulf %330, %352 : vector<2x128xf32>
    %354 = arith.addf %315, %353 : vector<2x128xf32>
    %355 = vector.broadcast %6 : f32 to vector<2x128xf32>
    %356 = arith.mulf %122, %355 : vector<2x128xf32>
    %357 = vector.broadcast %14 : f32 to vector<2x128xf32>
    %358 = arith.mulf %124, %357 : vector<2x128xf32>
    %359 = arith.addf %356, %358 : vector<2x128xf32>
    %360 = vector.broadcast %22 : f32 to vector<2x128xf32>
    %361 = arith.mulf %126, %360 : vector<2x128xf32>
    %362 = arith.addf %359, %361 : vector<2x128xf32>
    %363 = vector.broadcast %30 : f32 to vector<2x128xf32>
    %364 = arith.mulf %128, %363 : vector<2x128xf32>
    %365 = arith.addf %362, %364 : vector<2x128xf32>
    %366 = vector.broadcast %38 : f32 to vector<2x128xf32>
    %367 = arith.addf %365, %366 : vector<2x128xf32>
    %cst_230 = arith.constant 0.000000e+00 : f32
    %368 = vector.broadcast %cst_230 : f32 to vector<2x128xf32>
    %369 = arith.maximumf %367, %368 : vector<2x128xf32>
    %370 = vector.broadcast %88 : f32 to vector<2x128xf32>
    %371 = arith.mulf %369, %370 : vector<2x128xf32>
    %372 = arith.addf %333, %371 : vector<2x128xf32>
    %373 = vector.broadcast %89 : f32 to vector<2x128xf32>
    %374 = arith.mulf %369, %373 : vector<2x128xf32>
    %375 = arith.addf %336, %374 : vector<2x128xf32>
    %376 = vector.broadcast %90 : f32 to vector<2x128xf32>
    %377 = arith.mulf %369, %376 : vector<2x128xf32>
    %378 = arith.addf %339, %377 : vector<2x128xf32>
    %379 = vector.broadcast %91 : f32 to vector<2x128xf32>
    %380 = arith.mulf %369, %379 : vector<2x128xf32>
    %381 = arith.addf %342, %380 : vector<2x128xf32>
    %382 = vector.broadcast %92 : f32 to vector<2x128xf32>
    %383 = arith.mulf %369, %382 : vector<2x128xf32>
    %384 = arith.addf %345, %383 : vector<2x128xf32>
    %385 = vector.broadcast %93 : f32 to vector<2x128xf32>
    %386 = arith.mulf %369, %385 : vector<2x128xf32>
    %387 = arith.addf %348, %386 : vector<2x128xf32>
    %388 = vector.broadcast %94 : f32 to vector<2x128xf32>
    %389 = arith.mulf %369, %388 : vector<2x128xf32>
    %390 = arith.addf %351, %389 : vector<2x128xf32>
    %391 = vector.broadcast %95 : f32 to vector<2x128xf32>
    %392 = arith.mulf %369, %391 : vector<2x128xf32>
    %393 = arith.addf %354, %392 : vector<2x128xf32>
    %394 = vector.broadcast %7 : f32 to vector<2x128xf32>
    %395 = arith.mulf %122, %394 : vector<2x128xf32>
    %396 = vector.broadcast %15 : f32 to vector<2x128xf32>
    %397 = arith.mulf %124, %396 : vector<2x128xf32>
    %398 = arith.addf %395, %397 : vector<2x128xf32>
    %399 = vector.broadcast %23 : f32 to vector<2x128xf32>
    %400 = arith.mulf %126, %399 : vector<2x128xf32>
    %401 = arith.addf %398, %400 : vector<2x128xf32>
    %402 = vector.broadcast %31 : f32 to vector<2x128xf32>
    %403 = arith.mulf %128, %402 : vector<2x128xf32>
    %404 = arith.addf %401, %403 : vector<2x128xf32>
    %405 = vector.broadcast %39 : f32 to vector<2x128xf32>
    %406 = arith.addf %404, %405 : vector<2x128xf32>
    %cst_231 = arith.constant 0.000000e+00 : f32
    %407 = vector.broadcast %cst_231 : f32 to vector<2x128xf32>
    %408 = arith.maximumf %406, %407 : vector<2x128xf32>
    %409 = vector.broadcast %96 : f32 to vector<2x128xf32>
    %410 = arith.mulf %408, %409 : vector<2x128xf32>
    %411 = arith.addf %372, %410 : vector<2x128xf32>
    %412 = vector.broadcast %97 : f32 to vector<2x128xf32>
    %413 = arith.mulf %408, %412 : vector<2x128xf32>
    %414 = arith.addf %375, %413 : vector<2x128xf32>
    %415 = vector.broadcast %98 : f32 to vector<2x128xf32>
    %416 = arith.mulf %408, %415 : vector<2x128xf32>
    %417 = arith.addf %378, %416 : vector<2x128xf32>
    %418 = vector.broadcast %99 : f32 to vector<2x128xf32>
    %419 = arith.mulf %408, %418 : vector<2x128xf32>
    %420 = arith.addf %381, %419 : vector<2x128xf32>
    %421 = vector.broadcast %100 : f32 to vector<2x128xf32>
    %422 = arith.mulf %408, %421 : vector<2x128xf32>
    %423 = arith.addf %384, %422 : vector<2x128xf32>
    %424 = vector.broadcast %101 : f32 to vector<2x128xf32>
    %425 = arith.mulf %408, %424 : vector<2x128xf32>
    %426 = arith.addf %387, %425 : vector<2x128xf32>
    %427 = vector.broadcast %102 : f32 to vector<2x128xf32>
    %428 = arith.mulf %408, %427 : vector<2x128xf32>
    %429 = arith.addf %390, %428 : vector<2x128xf32>
    %430 = vector.broadcast %103 : f32 to vector<2x128xf32>
    %431 = arith.mulf %408, %430 : vector<2x128xf32>
    %432 = arith.addf %393, %431 : vector<2x128xf32>
    %433 = vector.broadcast %104 : f32 to vector<2x128xf32>
    %434 = arith.addf %411, %433 : vector<2x128xf32>
    %cst_232 = arith.constant 0.000000e+00 : f32
    %435 = vector.broadcast %cst_232 : f32 to vector<2x128xf32>
    %436 = arith.maximumf %434, %435 : vector<2x128xf32>
    %437 = vector.broadcast %112 : f32 to vector<2x128xf32>
    %438 = arith.mulf %436, %437 : vector<2x128xf32>
    %439 = vector.broadcast %105 : f32 to vector<2x128xf32>
    %440 = arith.addf %414, %439 : vector<2x128xf32>
    %cst_233 = arith.constant 0.000000e+00 : f32
    %441 = vector.broadcast %cst_233 : f32 to vector<2x128xf32>
    %442 = arith.maximumf %440, %441 : vector<2x128xf32>
    %443 = vector.broadcast %113 : f32 to vector<2x128xf32>
    %444 = arith.mulf %442, %443 : vector<2x128xf32>
    %445 = arith.addf %438, %444 : vector<2x128xf32>
    %446 = vector.broadcast %106 : f32 to vector<2x128xf32>
    %447 = arith.addf %417, %446 : vector<2x128xf32>
    %cst_234 = arith.constant 0.000000e+00 : f32
    %448 = vector.broadcast %cst_234 : f32 to vector<2x128xf32>
    %449 = arith.maximumf %447, %448 : vector<2x128xf32>
    %450 = vector.broadcast %114 : f32 to vector<2x128xf32>
    %451 = arith.mulf %449, %450 : vector<2x128xf32>
    %452 = arith.addf %445, %451 : vector<2x128xf32>
    %453 = vector.broadcast %107 : f32 to vector<2x128xf32>
    %454 = arith.addf %420, %453 : vector<2x128xf32>
    %cst_235 = arith.constant 0.000000e+00 : f32
    %455 = vector.broadcast %cst_235 : f32 to vector<2x128xf32>
    %456 = arith.maximumf %454, %455 : vector<2x128xf32>
    %457 = vector.broadcast %115 : f32 to vector<2x128xf32>
    %458 = arith.mulf %456, %457 : vector<2x128xf32>
    %459 = arith.addf %452, %458 : vector<2x128xf32>
    %460 = vector.broadcast %108 : f32 to vector<2x128xf32>
    %461 = arith.addf %423, %460 : vector<2x128xf32>
    %cst_236 = arith.constant 0.000000e+00 : f32
    %462 = vector.broadcast %cst_236 : f32 to vector<2x128xf32>
    %463 = arith.maximumf %461, %462 : vector<2x128xf32>
    %464 = vector.broadcast %116 : f32 to vector<2x128xf32>
    %465 = arith.mulf %463, %464 : vector<2x128xf32>
    %466 = arith.addf %459, %465 : vector<2x128xf32>
    %467 = vector.broadcast %109 : f32 to vector<2x128xf32>
    %468 = arith.addf %426, %467 : vector<2x128xf32>
    %cst_237 = arith.constant 0.000000e+00 : f32
    %469 = vector.broadcast %cst_237 : f32 to vector<2x128xf32>
    %470 = arith.maximumf %468, %469 : vector<2x128xf32>
    %471 = vector.broadcast %117 : f32 to vector<2x128xf32>
    %472 = arith.mulf %470, %471 : vector<2x128xf32>
    %473 = arith.addf %466, %472 : vector<2x128xf32>
    %474 = vector.broadcast %110 : f32 to vector<2x128xf32>
    %475 = arith.addf %429, %474 : vector<2x128xf32>
    %cst_238 = arith.constant 0.000000e+00 : f32
    %476 = vector.broadcast %cst_238 : f32 to vector<2x128xf32>
    %477 = arith.maximumf %475, %476 : vector<2x128xf32>
    %478 = vector.broadcast %118 : f32 to vector<2x128xf32>
    %479 = arith.mulf %477, %478 : vector<2x128xf32>
    %480 = arith.addf %473, %479 : vector<2x128xf32>
    %481 = vector.broadcast %111 : f32 to vector<2x128xf32>
    %482 = arith.addf %432, %481 : vector<2x128xf32>
    %cst_239 = arith.constant 0.000000e+00 : f32
    %483 = vector.broadcast %cst_239 : f32 to vector<2x128xf32>
    %484 = arith.maximumf %482, %483 : vector<2x128xf32>
    %485 = vector.broadcast %119 : f32 to vector<2x128xf32>
    %486 = arith.mulf %484, %485 : vector<2x128xf32>
    %487 = arith.addf %480, %486 : vector<2x128xf32>
    %488 = vector.broadcast %120 : f32 to vector<2x128xf32>
    %489 = arith.addf %487, %488 : vector<2x128xf32>
    %c0_240 = arith.constant 0 : index
    %c0_241 = arith.constant 0 : index
    %c0_242 = arith.constant 0 : index
    %490 = vector.load %arg9[%c0_240, %c0_241, %c0_242] : memref<1x2x128xf32, #tpu.memory_space<vmem>>, vector<1x2x128xf32>
    %491 = vector.shape_cast %490 : vector<1x2x128xf32> to vector<2x128xf32>
    %492 = vector.shape_cast %489 : vector<2x128xf32> to vector<1x2x128xf32>
    tpu.vector_store %arg9[%c0_240, %c0_241, %c0_242], %492 {strides = array<i32>} : memref<1x2x128xf32, #tpu.memory_space<vmem>>, vector<1x2x128xf32>,
    return
  }
  func.func @transform_0(%arg0: i32, %arg1: i32, %arg2: memref<4x8xf32, #tpu.memory_space<smem>>, %arg3: memref<8xf32, #tpu.memory_space<smem>>, %arg4: memref<8x8xf32, #tpu.memory_space<smem>>, %arg5: memref<8xf32, #tpu.memory_space<smem>>, %arg6: memref<8xf32, #tpu.memory_space<smem>>, %arg7: memref<1xf32, #tpu.memory_space<smem>>) -> (i32, i32, i32, i32) {
    %c0_i32 = arith.constant 0 : i32
    %c0_i32_0 = arith.constant 0 : i32
    %c0_i32_1 = arith.constant 0 : i32
    return %arg0, %c0_i32, %arg1, %c0_i32_0 : i32, i32, i32, i32
  }
  func.func @transform_1(%arg0: i32, %arg1: i32, %arg2: memref<4x8xf32, #tpu.memory_space<smem>>, %arg3: memref<8xf32, #tpu.memory_space<smem>>, %arg4: memref<8x8xf32, #tpu.memory_space<smem>>, %arg5: memref<8xf32, #tpu.memory_space<smem>>, %arg6: memref<8xf32, #tpu.memory_space<smem>>, %arg7: memref<1xf32, #tpu.memory_space<smem>>) -> (i32, i32, i32) {
    %c0_i32 = arith.constant 0 : i32
    %c0_i32_0 = arith.constant 0 : i32
    return %arg0, %arg1, %c0_i32 : i32, i32, i32
  }
}

</mosaic_0001>

<llo_original>
// kernel: tpu_custom_call.1
$region0: #{tpu_custom_call.1}
  #allocation0 [shape = 'u32[]', space=smem, size = 0x4, offset = 0x4, fixed_abs, tag = 'smem constant byte address 0x4 - core index']
  #allocation1 [shape = 'u32[144,128]{1,0:T(1,128)}', space=vmem, size = 0x12000, scoped, tag = 'internal scratch']
  #allocation2 [shape = 's32[1]{0}', space=sflag, size = 0x4, scoped, tag = 'scoped memory for tpu_custom_call.1']
  #allocation3 [shape = 'u8[2048]{0}', space=smem, size = 0x800, scoped, tag = 'prefetched SMEM operand 0']
  #allocation4 [shape = 'u8[512]{0}', space=smem, size = 0x200, scoped, tag = 'prefetched SMEM operand 1']
  #allocation5 [shape = 'u8[4096]{0}', space=smem, size = 0x1000, scoped, tag = 'prefetched SMEM operand 2']
  #allocation6 [shape = 'u8[512]{0}', space=smem, size = 0x200, scoped, tag = 'prefetched SMEM operand 3']
  #allocation7 [shape = 'u8[512]{0}', space=smem, size = 0x200, scoped, tag = 'prefetched SMEM operand 4']
  #allocation8 [shape = 'f32[1]{0:T(128)S(6)}', space=smem, size = 0x200, scoped, tag = 'prefetched SMEM operand 5']
  %s0 = inlined_call_operand.hbm [shape: f32[4,8], index: 0, kind: input, shape index: {}]
  %s1 = inlined_call_operand.vmem [shape: f32[8], index: 1, kind: input, shape index: {}]
  %s2 = inlined_call_operand.hbm [shape: f32[8,8], index: 2, kind: input, shape index: {}]
  %s3 = inlined_call_operand.vmem [shape: f32[8], index: 3, kind: input, shape index: {}]
  %s4 = inlined_call_operand.vmem [shape: f32[8], index: 4, kind: input, shape index: {}]
  %s5 = inlined_call_operand.<no memory space> [shape: f32[1], index: 5, kind: input, shape index: {}]
  %s6 = inlined_call_operand.hbm [shape: f32[2,4,2,128], index: 6, kind: input, shape index: {}]
  %s7 = inlined_call_operand.hbm [shape: f32[2,2,128], index: 7, kind: output, shape index: {}]
  %s8 = sld [smem:[#allocation0]]
  $region41: #{tpu_custom_call.1} parent=0
    _
  %s10 = ssub.s32 1, %s8
  %s11 = scalar_select 0, %s10, %s8
  %13 = dma.hbm_to_smem %s0, 64, [#allocation3], [#allocation2]
  %s14 = sshll.u32 %s1, 4
  %s15 = int_to_ptr.vmem [resolvable:$true] %s14
  %17 = dma.vmem_to_smem %s15, 16, [#allocation4], [#allocation2]
  %19 = dma.hbm_to_smem %s2, 128, [#allocation5], [#allocation2]
  %s20 = sshll.u32 %s3, 4
  %s21 = int_to_ptr.vmem [resolvable:$true] %s20
  %23 = dma.vmem_to_smem %s21, 16, [#allocation6], [#allocation2]
  %s24 = sshll.u32 %s4, 4
  %s25 = int_to_ptr.vmem [resolvable:$true] %s24
  %27 = dma.vmem_to_smem %s25, 16, [#allocation7], [#allocation2]
  %28 = sst [smem:[#allocation8]] %s5
  %29 = dma.done [#allocation2], 240
  %30 = sfence
  $region1: #{tpu_custom_call.1} parent=0
    #allocation9 [shape = 'u8[8192]{0}', space=vmem, size = 0x2000, scoped, tag = 'input window, operand 6']
    #allocation10 [shape = 's32[2]{0}', space=sflag, size = 0x8, scoped, tag = 'scoped memory for tpu_custom_call.1']
    #allocation11 [shape = 's32[2]{0}', space=sflag, size = 0x8, scoped, tag = 'scoped memory for tpu_custom_call.1']
    #allocation12 [shape = 'u8[2048]{0}', space=vmem, size = 0x800, scoped, tag = 'output window, operand 0']
    %31 = vsyncpa [#allocation10], 0
    %s32 = scalar_lea.sflag [#allocation10], 1
    %33 = vsyncpa %s32, 0
    %34 = vsyncpa [#allocation11], 0
    %s35 = scalar_lea.sflag [#allocation11], 1
    %36 = vsyncpa %s35, 0
    loop: start=0, step=1, limit=4
    $region2: #{tpu_custom_call.1} parent=1 // loop_pre_header
      _
    $region3: #{tpu_custom_call.1} parent=1 // loop_header
      %s38 = sphi 0, %s42
      %p39 = scmp.ge.s32.totalorder %s38, 4
      %s45 = sphi 0, %s57
      %s46 = sphi 0, %s53
      %s47 = sphi 0, %s45
      %s48 = sphi 0, %s46
      %s49 = sphi 0, %s47
      %s50 = sphi 0, %s48
      %s62 = sphi 0, %s64
      %s65 = sphi 0, %s62
      %s66 = sphi 0, %s65
      %s82 = sphi 0, %s66
      %s90 = sphi 0, %s92
      %s93 = sphi 0, %s90
      %s94 = sphi 0, %s93
      %s110 = sphi 0, %s94
    $region4: #{tpu_custom_call.1} parent=1 // loop_header_branch
      %41 = sbr.rel (%p39) target = $region8
    $region5: #{tpu_custom_call.1} parent=1 // loop_body
      %s43 = ssub.s32 %s38, 1
      %s44 = ssub.s32 %s38, 2
      %s51 = sadd.s32 1, %s46
      %p52 = scmp.ge.s32.totalorder %s51, 1
      %s53 = scalar_select %p52, 0, %s51
      %s54 = sadd.s32 1, %s45
      %s55 = scalar_select %p52, %s54, %s45
      %p56 = scmp.ge.s32.totalorder %s55, 2
      %s57 = scalar_select %p56, 0, %s55
      %s58 = ssub.s32 %s45, %s57
      %s59 = ssub.s32 %s46, %s53
      %s60 = sor.u32 %s58, %s59
      %p61 = scmp.eq.s32.totalorder %s60, 0
      %s63 = sadd.s32 %s62, 1
      %s64 = scalar_select %p61, %s62, %s63
      %p67 = pneg %p61
      %p68 = scmp.eq.s32.totalorder %s38, 1
      %p69 = por %p67, %p68
      %p70 = scmp.ne.s32.totalorder %s62, %s65
      %p71 = scmp.eq.s32.totalorder %s38, 0
      %p72 = por %p70, %p71
      %p73 = scmp.ne.s32.totalorder %s62, %s65
      %p74 = scmp.eq.s32.totalorder %s43, 1
      %p75 = por %p73, %p74
      %p76 = scmp.ne.s32.totalorder %s65, %s66
      %p77 = scmp.eq.s32.totalorder %s43, 0
      %p78 = por %p76, %p77
      %p79 = scmp.ne.s32.totalorder %s65, %s66
      %p80 = scmp.eq.s32.totalorder %s44, 1
      %p81 = por %p79, %p80
      %p83 = scmp.ne.s32.totalorder %s66, %s82
      %p84 = scmp.eq.s32.totalorder %s44, 0
      %p85 = por %p83, %p84
      %s86 = ssub.s32 %s45, %s57
      %s87 = ssub.s32 %s46, %s53
      %s88 = sor.u32 %s86, %s87
      %p89 = scmp.eq.s32.totalorder %s88, 0
      %s91 = sadd.s32 %s90, 1
      %s92 = scalar_select %p89, %s90, %s91
      %p95 = pneg %p89
      %p96 = scmp.eq.s32.totalorder %s38, 1
      %p97 = por %p95, %p96
      %p98 = scmp.ne.s32.totalorder %s90, %s93
      %p99 = scmp.eq.s32.totalorder %s38, 0
      %p100 = por %p98, %p99
      %p101 = scmp.ne.s32.totalorder %s90, %s93
      %p102 = scmp.eq.s32.totalorder %s43, 1
      %p103 = por %p101, %p102
      %p104 = scmp.ne.s32.totalorder %s93, %s94
      %p105 = scmp.eq.s32.totalorder %s43, 0
      %p106 = por %p104, %p105
      %p107 = scmp.ne.s32.totalorder %s93, %s94
      %p108 = scmp.eq.s32.totalorder %s44, 1
      %p109 = por %p107, %p108
      %p111 = scmp.ne.s32.totalorder %s94, %s110
      %p112 = scmp.eq.s32.totalorder %s44, 0
      %p113 = por %p111, %p112
      %p114 = scmp.le.s32.totalorder 1, %s38
      %p115 = scmp.lt.s32.totalorder %s38, 3
      %p116 = pnand %p114, %p115
      %p117 = pneg %p116
      // Predicated region
      $region9: #{tpu_custom_call.1} parent=5 // pred_check
        _
      $region10: #{tpu_custom_call.1} parent=5 // pred_check_branch
        %119 = sbr.rel (%p116) target = $region12
      $region11: #{tpu_custom_call.1} parent=5 // pred_region
        %s120 = ssub.s32 %s38, 1
      $region12: #{tpu_custom_call.1} parent=5 // pred_fallthru
        _
      %p121 = scmp.lt.s32.totalorder %s38, 2
      // Predicated region
      $region13: #{tpu_custom_call.1} parent=5 // pred_check
        %p122 = pneg %p121
      $region14: #{tpu_custom_call.1} parent=5 // pred_check_branch
        %124 = sbr.rel (%p122) target = $region16
      $region15: #{tpu_custom_call.1} parent=5 // pred_region
        // Predicated region
        $region17: #{tpu_custom_call.1} parent=15 // pred_check
          %p125 = pneg %p72
        $region18: #{tpu_custom_call.1} parent=15 // pred_check_branch
          %127 = sbr.rel (%p125) target = $region20
        $region19: #{tpu_custom_call.1} parent=15 // pred_region
          %s128 = sand.u32 %s62, 1
          %s129 = scalar_lea.sflag [#allocation10], %s128
          %s130 = sand.u32 %s62, 1
          %s131 = smul.addr %s130, 8
          %s132 = scalar_lea.vmem [#allocation9], %s131
          %s134 = ssub.s32 128, 128
          %135 = vsyncadd %s129, %s134
          %s136 = smul.addr %s45, 4
          %s137 = sadd.s32 %s46, %s136
          %s138 = smul.addr %s137, 32
          %s139 = scalar_lea.hbm %s6, %s138
          %s140 = sshll.u32 %s132, 4
          %s141 = int_to_ptr.vmem [resolvable:$true] %s140
          %146 = dma.hbm_to_vmem [thread:$0]  %s139, 128, %s141, %s129, 32, 32, 2
        $region20: #{tpu_custom_call.1} parent=15 // pred_fallthru
          _
      $region16: #{tpu_custom_call.1} parent=5 // pred_fallthru
        _
      %p147 = scmp.le.s32.totalorder 1, %s38
      %p148 = scmp.lt.s32.totalorder %s38, 3
      %p149 = pnand %p147, %p148
      %p150 = pneg %p149
      // Predicated region
      $region21: #{tpu_custom_call.1} parent=5 // pred_check
        _
      $region22: #{tpu_custom_call.1} parent=5 // pred_check_branch
        %152 = sbr.rel (%p149) target = $region24
      $region23: #{tpu_custom_call.1} parent=5 // pred_region
        %s153 = ssub.s32 %s38, 1
        %s154 = sand.u32 %s65, 1
        %s155 = scalar_lea.sflag [#allocation10], %s154
        %s156 = sand.u32 %s65, 1
        %s157 = smul.addr %s156, 8
        %s158 = scalar_lea.vmem [#allocation9], %s157
        // Predicated region
        $region25: #{tpu_custom_call.1} parent=23 // pred_check
          %p159 = pneg %p78
        $region26: #{tpu_custom_call.1} parent=23 // pred_check_branch
          %161 = sbr.rel (%p159) target = $region28
        $region27: #{tpu_custom_call.1} parent=23 // pred_region
          %162 = dma.done %s155, 128
        $region28: #{tpu_custom_call.1} parent=23 // pred_fallthru
          _
        %s163 = sand.u32 %s65, 1
        %s164 = scalar_lea.sflag [#allocation10], %s163
        %s165 = sand.u32 %s65, 1
        %s166 = smul.addr %s165, 8
        %s167 = scalar_lea.vmem [#allocation9], %s166
        %p168 = pneg %p78
        %p169 = pneg %p75
        %p170 = pneg %p106
        %p171 = pneg %p103
        %s172 = sand.u32 %s93, 1
        %s173 = scalar_lea.sflag [#allocation11], %s172
        %s174 = sand.u32 %s93, 1
        %s175 = smul.addr %s174, 2
        %s176 = scalar_lea.vmem [#allocation12], %s175
        %s177 = sld [smem:[#allocation3]]
        %s178 = sld [smem:[#allocation3 + $0x1]]
        %s179 = sld [smem:[#allocation3 + $0x2]]
        %s180 = sld [smem:[#allocation3 + $0x3]]
        %s181 = sld [smem:[#allocation3 + $0x4]]
        %s182 = sld [smem:[#allocation3 + $0x5]]
        %s183 = sld [smem:[#allocation3 + $0x6]]
        %s184 = sld [smem:[#allocation3 + $0x7]]
        %s185 = sld [smem:[#allocation3 + $0x80]]
        %s186 = sld [smem:[#allocation3 + $0x81]]
        %s187 = sld [smem:[#allocation3 + $0x82]]
        %s188 = sld [smem:[#allocation3 + $0x83]]
        %s189 = sld [smem:[#allocation3 + $0x84]]
        %s190 = sld [smem:[#allocation3 + $0x85]]
        %s191 = sld [smem:[#allocation3 + $0x86]]
        %s192 = sld [smem:[#allocation3 + $0x87]]
        %s193 = sld [smem:[#allocation3 + $0x100]]
        %s194 = sld [smem:[#allocation3 + $0x101]]
        %s195 = sld [smem:[#allocation3 + $0x102]]
        %s196 = sld [smem:[#allocation3 + $0x103]]
        %s197 = sld [smem:[#allocation3 + $0x104]]
        %s198 = sld [smem:[#allocation3 + $0x105]]
        %s199 = sld [smem:[#allocation3 + $0x106]]
        %s200 = sld [smem:[#allocation3 + $0x107]]
        %s201 = sld [smem:[#allocation3 + $0x180]]
        %s202 = sld [smem:[#allocation3 + $0x181]]
        %s203 = sld [smem:[#allocation3 + $0x182]]
        %s204 = sld [smem:[#allocation3 + $0x183]]
        %s205 = sld [smem:[#allocation3 + $0x184]]
        %s206 = sld [smem:[#allocation3 + $0x185]]
        %s207 = sld [smem:[#allocation3 + $0x186]]
        %s208 = sld [smem:[#allocation3 + $0x187]]
        %s209 = sld [smem:[#allocation4]]
        %s210 = sld [smem:[#allocation4 + $0x1]]
        %s211 = sld [smem:[#allocation4 + $0x2]]
        %s212 = sld [smem:[#allocation4 + $0x3]]
        %s213 = sld [smem:[#allocation4 + $0x4]]
        %s214 = sld [smem:[#allocation4 + $0x5]]
        %s215 = sld [smem:[#allocation4 + $0x6]]
        %s216 = sld [smem:[#allocation4 + $0x7]]
        %s217 = sld [smem:[#allocation5]]
        %s218 = sld [smem:[#allocation5 + $0x1]]
        %s219 = sld [smem:[#allocation5 + $0x2]]
        %s220 = sld [smem:[#allocation5 + $0x3]]
        %s221 = sld [smem:[#allocation5 + $0x4]]
        %s222 = sld [smem:[#allocation5 + $0x5]]
        %s223 = sld [smem:[#allocation5 + $0x6]]
        %s224 = sld [smem:[#allocation5 + $0x7]]
        %s225 = sld [smem:[#allocation5 + $0x80]]
        %s226 = sld [smem:[#allocation5 + $0x81]]
        %s227 = sld [smem:[#allocation5 + $0x82]]
        %s228 = sld [smem:[#allocation5 + $0x83]]
        %s229 = sld [smem:[#allocation5 + $0x84]]
        %s230 = sld [smem:[#allocation5 + $0x85]]
        %s231 = sld [smem:[#allocation5 + $0x86]]
        %s232 = sld [smem:[#allocation5 + $0x87]]
        %s233 = sld [smem:[#allocation5 + $0x100]]
        %s234 = sld [smem:[#allocation5 + $0x101]]
        %s235 = sld [smem:[#allocation5 + $0x102]]
        %s236 = sld [smem:[#allocation5 + $0x103]]
        %s237 = sld [smem:[#allocation5 + $0x104]]
        %s238 = sld [smem:[#allocation5 + $0x105]]
        %s239 = sld [smem:[#allocation5 + $0x106]]
        %s240 = sld [smem:[#allocation5 + $0x107]]
        %s241 = sld [smem:[#allocation5 + $0x180]]
        %s242 = sld [smem:[#allocation5 + $0x181]]
        %s243 = sld [smem:[#allocation5 + $0x182]]
        %s244 = sld [smem:[#allocation5 + $0x183]]
        %s245 = sld [smem:[#allocation5 + $0x184]]
        %s246 = sld [smem:[#allocation5 + $0x185]]
        %s247 = sld [smem:[#allocation5 + $0x186]]
        %s248 = sld [smem:[#allocation5 + $0x187]]
        %s249 = sld [smem:[#allocation5 + $0x200]]
        %s250 = sld [smem:[#allocation5 + $0x201]]
        %s251 = sld [smem:[#allocation5 + $0x202]]
        %s252 = sld [smem:[#allocation5 + $0x203]]
        %s253 = sld [smem:[#allocation5 + $0x204]]
        %s254 = sld [smem:[#allocation5 + $0x205]]
        %s255 = sld [smem:[#allocation5 + $0x206]]
        %s256 = sld [smem:[#allocation5 + $0x207]]
        %s257 = sld [smem:[#allocation5 + $0x280]]
        %s258 = sld [smem:[#allocation5 + $0x281]]
        %s259 = sld [smem:[#allocation5 + $0x282]]
        %s260 = sld [smem:[#allocation5 + $0x283]]
        %s261 = sld [smem:[#allocation5 + $0x284]]
        %s262 = sld [smem:[#allocation5 + $0x285]]
        %s263 = sld [smem:[#allocation5 + $0x286]]
        %s264 = sld [smem:[#allocation5 + $0x287]]
        %s265 = sld [smem:[#allocation5 + $0x300]]
        %s266 = sld [smem:[#allocation5 + $0x301]]
        %s267 = sld [smem:[#allocation5 + $0x302]]
        %s268 = sld [smem:[#allocation5 + $0x303]]
        %s269 = sld [smem:[#allocation5 + $0x304]]
        %s270 = sld [smem:[#allocation5 + $0x305]]
        %s271 = sld [smem:[#allocation5 + $0x306]]
        %s272 = sld [smem:[#allocation5 + $0x307]]
        %s273 = sld [smem:[#allocation5 + $0x380]]
        %s274 = sld [smem:[#allocation5 + $0x381]]
        %s275 = sld [smem:[#allocation5 + $0x382]]
        %s276 = sld [smem:[#allocation5 + $0x383]]
        %s277 = sld [smem:[#allocation5 + $0x384]]
        %s278 = sld [smem:[#allocation5 + $0x385]]
        %s279 = sld [smem:[#allocation5 + $0x386]]
        %s280 = sld [smem:[#allocation5 + $0x387]]
        %s281 = sld [smem:[#allocation6]]
        %s282 = sld [smem:[#allocation6 + $0x1]]
        %s283 = sld [smem:[#allocation6 + $0x2]]
        %s284 = sld [smem:[#allocation6 + $0x3]]
        %s285 = sld [smem:[#allocation6 + $0x4]]
        %s286 = sld [smem:[#allocation6 + $0x5]]
        %s287 = sld [smem:[#allocation6 + $0x6]]
        %s288 = sld [smem:[#allocation6 + $0x7]]
        %s289 = sld [smem:[#allocation7]]
        %s290 = sld [smem:[#allocation7 + $0x1]]
        %s291 = sld [smem:[#allocation7 + $0x2]]
        %s292 = sld [smem:[#allocation7 + $0x3]]
        %s293 = sld [smem:[#allocation7 + $0x4]]
        %s294 = sld [smem:[#allocation7 + $0x5]]
        %s295 = sld [smem:[#allocation7 + $0x6]]
        %s296 = sld [smem:[#allocation7 + $0x7]]
        %s297 = sld [smem:[#allocation8]]
        %v298 = vld [vmem:[%s158] sm:$0x3]
        %s299 = scalar_lea.vmem %s158, 2 [#allocation9]
        %v300 = vld [vmem:[%s299] sm:$0x3]
        %s301 = scalar_lea.vmem %s158, 4 [#allocation9]
        %v302 = vld [vmem:[%s301] sm:$0x3]
        %s303 = scalar_lea.vmem %s158, 6 [#allocation9]
        %v304 = vld [vmem:[%s303] sm:$0x3]
        %v305 = vstv %s177
        %v306 = vmul.f32 %v298, %v305
        %v307 = vstv %s185
        %v308 = vmul.f32 %v300, %v307
        %v309 = vadd.f32 %v306, %v308
        %v310 = vstv %s193
        %v311 = vmul.f32 %v302, %v310
        %v312 = vadd.f32 %v309, %v311
        %v313 = vstv %s201
        %v314 = vmul.f32 %v304, %v313
        %v315 = vadd.f32 %v312, %v314
        %v316 = vstv %s209
        %v317 = vadd.f32 %v315, %v316
        %v318 = vmax.f32 %v317, 0.0
        %v319 = vstv %s217
        %v320 = vmul.f32 %v318, %v319
        %v321 = vstv %s218
        %v322 = vmul.f32 %v318, %v321
        %v323 = vstv %s219
        %v324 = vmul.f32 %v318, %v323
        %v325 = vstv %s220
        %v326 = vmul.f32 %v318, %v325
        %v327 = vstv %s221
        %v328 = vmul.f32 %v318, %v327
        %v329 = vstv %s222
        %v330 = vmul.f32 %v318, %v329
        %v331 = vstv %s223
        %v332 = vmul.f32 %v318, %v331
        %v333 = vstv %s224
        %v334 = vmul.f32 %v318, %v333
        %v335 = vstv %s178
        %v336 = vmul.f32 %v298, %v335
        %v337 = vstv %s186
        %v338 = vmul.f32 %v300, %v337
        %v339 = vadd.f32 %v336, %v338
        %v340 = vstv %s194
        %v341 = vmul.f32 %v302, %v340
        %v342 = vadd.f32 %v339, %v341
        %v343 = vstv %s202
        %v344 = vmul.f32 %v304, %v343
        %v345 = vadd.f32 %v342, %v344
        %v346 = vstv %s210
        %v347 = vadd.f32 %v345, %v346
        %v348 = vmax.f32 %v347, 0.0
        %v349 = vstv %s225
        %v350 = vmul.f32 %v348, %v349
        %v351 = vadd.f32 %v320, %v350
        %v352 = vstv %s226
        %v353 = vmul.f32 %v348, %v352
        %v354 = vadd.f32 %v322, %v353
        %v355 = vstv %s227
        %v356 = vmul.f32 %v348, %v355
        %v357 = vadd.f32 %v324, %v356
        %v358 = vstv %s228
        %v359 = vmul.f32 %v348, %v358
        %v360 = vadd.f32 %v326, %v359
        %v361 = vstv %s229
        %v362 = vmul.f32 %v348, %v361
        %v363 = vadd.f32 %v328, %v362
        %v364 = vstv %s230
        %v365 = vmul.f32 %v348, %v364
        %v366 = vadd.f32 %v330, %v365
        %v367 = vstv %s231
        %v368 = vmul.f32 %v348, %v367
        %v369 = vadd.f32 %v332, %v368
        %v370 = vstv %s232
        %v371 = vmul.f32 %v348, %v370
        %v372 = vadd.f32 %v334, %v371
        %v373 = vstv %s179
        %v374 = vmul.f32 %v298, %v373
        %v375 = vstv %s187
        %v376 = vmul.f32 %v300, %v375
        %v377 = vadd.f32 %v374, %v376
        %v378 = vstv %s195
        %v379 = vmul.f32 %v302, %v378
        %v380 = vadd.f32 %v377, %v379
        %v381 = vstv %s203
        %v382 = vmul.f32 %v304, %v381
        %v383 = vadd.f32 %v380, %v382
        %v384 = vstv %s211
        %v385 = vadd.f32 %v383, %v384
        %v386 = vmax.f32 %v385, 0.0
        %v387 = vstv %s233
        %v388 = vmul.f32 %v386, %v387
        %v389 = vadd.f32 %v351, %v388
        %v390 = vstv %s234
        %v391 = vmul.f32 %v386, %v390
        %v392 = vadd.f32 %v354, %v391
        %v393 = vstv %s235
        %v394 = vmul.f32 %v386, %v393
        %v395 = vadd.f32 %v357, %v394
        %v396 = vstv %s236
        %v397 = vmul.f32 %v386, %v396
        %v398 = vadd.f32 %v360, %v397
        %v399 = vstv %s237
        %v400 = vmul.f32 %v386, %v399
        %v401 = vadd.f32 %v363, %v400
        %v402 = vstv %s238
        %v403 = vmul.f32 %v386, %v402
        %v404 = vadd.f32 %v366, %v403
        %v405 = vstv %s239
        %v406 = vmul.f32 %v386, %v405
        %v407 = vadd.f32 %v369, %v406
        %v408 = vstv %s240
        %v409 = vmul.f32 %v386, %v408
        %v410 = vadd.f32 %v372, %v409
        %v411 = vstv %s180
        %v412 = vmul.f32 %v298, %v411
        %v413 = vstv %s188
        %v414 = vmul.f32 %v300, %v413
        %v415 = vadd.f32 %v412, %v414
        %v416 = vstv %s196
        %v417 = vmul.f32 %v302, %v416
        %v418 = vadd.f32 %v415, %v417
        %v419 = vstv %s204
        %v420 = vmul.f32 %v304, %v419
        %v421 = vadd.f32 %v418, %v420
        %v422 = vstv %s212
        %v423 = vadd.f32 %v421, %v422
        %v424 = vmax.f32 %v423, 0.0
        %v425 = vstv %s241
        %v426 = vmul.f32 %v424, %v425
        %v427 = vadd.f32 %v389, %v426
        %v428 = vstv %s242
        %v429 = vmul.f32 %v424, %v428
        %v430 = vadd.f32 %v392, %v429
        %v431 = vstv %s243
        %v432 = vmul.f32 %v424, %v431
        %v433 = vadd.f32 %v395, %v432
        %v434 = vstv %s244
        %v435 = vmul.f32 %v424, %v434
        %v436 = vadd.f32 %v398, %v435
        %v437 = vstv %s245
        %v438 = vmul.f32 %v424, %v437
        %v439 = vadd.f32 %v401, %v438
        %v440 = vstv %s246
        %v441 = vmul.f32 %v424, %v440
        %v442 = vadd.f32 %v404, %v441
        %v443 = vstv %s247
        %v444 = vmul.f32 %v424, %v443
        %v445 = vadd.f32 %v407, %v444
        %v446 = vstv %s248
        %v447 = vmul.f32 %v424, %v446
        %v448 = vadd.f32 %v410, %v447
        %v449 = vstv %s181
        %v450 = vmul.f32 %v298, %v449
        %v451 = vstv %s189
        %v452 = vmul.f32 %v300, %v451
        %v453 = vadd.f32 %v450, %v452
        %v454 = vstv %s197
        %v455 = vmul.f32 %v302, %v454
        %v456 = vadd.f32 %v453, %v455
        %v457 = vstv %s205
        %v458 = vmul.f32 %v304, %v457
        %v459 = vadd.f32 %v456, %v458
        %v460 = vstv %s213
        %v461 = vadd.f32 %v459, %v460
        %v462 = vmax.f32 %v461, 0.0
        %v463 = vstv %s249
        %v464 = vmul.f32 %v462, %v463
        %v465 = vadd.f32 %v427, %v464
        %v466 = vstv %s250
        %v467 = vmul.f32 %v462, %v466
        %v468 = vadd.f32 %v430, %v467
        %v469 = vstv %s251
        %v470 = vmul.f32 %v462, %v469
        %v471 = vadd.f32 %v433, %v470
        %v472 = vstv %s252
        %v473 = vmul.f32 %v462, %v472
        %v474 = vadd.f32 %v436, %v473
        %v475 = vstv %s253
        %v476 = vmul.f32 %v462, %v475
        %v477 = vadd.f32 %v439, %v476
        %v478 = vstv %s254
        %v479 = vmul.f32 %v462, %v478
        %v480 = vadd.f32 %v442, %v479
        %v481 = vstv %s255
        %v482 = vmul.f32 %v462, %v481
        %v483 = vadd.f32 %v445, %v482
        %v484 = vstv %s256
        %v485 = vmul.f32 %v462, %v484
        %v486 = vadd.f32 %v448, %v485
        %v487 = vstv %s182
        %v488 = vmul.f32 %v298, %v487
        %v489 = vstv %s190
        %v490 = vmul.f32 %v300, %v489
        %v491 = vadd.f32 %v488, %v490
        %v492 = vstv %s198
        %v493 = vmul.f32 %v302, %v492
        %v494 = vadd.f32 %v491, %v493
        %v495 = vstv %s206
        %v496 = vmul.f32 %v304, %v495
        %v497 = vadd.f32 %v494, %v496
        %v498 = vstv %s214
        %v499 = vadd.f32 %v497, %v498
        %v500 = vmax.f32 %v499, 0.0
        %v501 = vstv %s257
        %v502 = vmul.f32 %v500, %v501
        %v503 = vadd.f32 %v465, %v502
        %v504 = vstv %s258
        %v505 = vmul.f32 %v500, %v504
        %v506 = vadd.f32 %v468, %v505
        %v507 = vstv %s259
        %v508 = vmul.f32 %v500, %v507
        %v509 = vadd.f32 %v471, %v508
        %v510 = vstv %s260
        %v511 = vmul.f32 %v500, %v510
        %v512 = vadd.f32 %v474, %v511
        %v513 = vstv %s261
        %v514 = vmul.f32 %v500, %v513
        %v515 = vadd.f32 %v477, %v514
        %v516 = vstv %s262
        %v517 = vmul.f32 %v500, %v516
        %v518 = vadd.f32 %v480, %v517
        %v519 = vstv %s263
        %v520 = vmul.f32 %v500, %v519
        %v521 = vadd.f32 %v483, %v520
        %v522 = vstv %s264
        %v523 = vmul.f32 %v500, %v522
        %v524 = vadd.f32 %v486, %v523
        %v525 = vstv %s183
        %v526 = vmul.f32 %v298, %v525
        %v527 = vstv %s191
        %v528 = vmul.f32 %v300, %v527
        %v529 = vadd.f32 %v526, %v528
        %v530 = vstv %s199
        %v531 = vmul.f32 %v302, %v530
        %v532 = vadd.f32 %v529, %v531
        %v533 = vstv %s207
        %v534 = vmul.f32 %v304, %v533
        %v535 = vadd.f32 %v532, %v534
        %v536 = vstv %s215
        %v537 = vadd.f32 %v535, %v536
        %v538 = vmax.f32 %v537, 0.0
        %v539 = vstv %s265
        %v540 = vmul.f32 %v538, %v539
        %v541 = vadd.f32 %v503, %v540
        %v542 = vstv %s266
        %v543 = vmul.f32 %v538, %v542
        %v544 = vadd.f32 %v506, %v543
        %v545 = vstv %s267
        %v546 = vmul.f32 %v538, %v545
        %v547 = vadd.f32 %v509, %v546
        %v548 = vstv %s268
        %v549 = vmul.f32 %v538, %v548
        %v550 = vadd.f32 %v512, %v549
        %v551 = vstv %s269
        %v552 = vmul.f32 %v538, %v551
        %v553 = vadd.f32 %v515, %v552
        %v554 = vstv %s270
        %v555 = vmul.f32 %v538, %v554
        %v556 = vadd.f32 %v518, %v555
        %v557 = vstv %s271
        %v558 = vmul.f32 %v538, %v557
        %v559 = vadd.f32 %v521, %v558
        %v560 = vstv %s272
        %v561 = vmul.f32 %v538, %v560
        %v562 = vadd.f32 %v524, %v561
        %v563 = vstv %s184
        %v564 = vmul.f32 %v298, %v563
        %v565 = vstv %s192
        %v566 = vmul.f32 %v300, %v565
        %v567 = vadd.f32 %v564, %v566
        %v568 = vstv %s200
        %v569 = vmul.f32 %v302, %v568
        %v570 = vadd.f32 %v567, %v569
        %v571 = vstv %s208
        %v572 = vmul.f32 %v304, %v571
        %v573 = vadd.f32 %v570, %v572
        %v574 = vstv %s216
        %v575 = vadd.f32 %v573, %v574
        %v576 = vmax.f32 %v575, 0.0
        %v577 = vstv %s273
        %v578 = vmul.f32 %v576, %v577
        %v579 = vadd.f32 %v541, %v578
        %v580 = vstv %s274
        %v581 = vmul.f32 %v576, %v580
        %v582 = vadd.f32 %v544, %v581
        %v583 = vstv %s275
        %v584 = vmul.f32 %v576, %v583
        %v585 = vadd.f32 %v547, %v584
        %v586 = vstv %s276
        %v587 = vmul.f32 %v576, %v586
        %v588 = vadd.f32 %v550, %v587
        %v589 = vstv %s277
        %v590 = vmul.f32 %v576, %v589
        %v591 = vadd.f32 %v553, %v590
        %v592 = vstv %s278
        %v593 = vmul.f32 %v576, %v592
        %v594 = vadd.f32 %v556, %v593
        %v595 = vstv %s279
        %v596 = vmul.f32 %v576, %v595
        %v597 = vadd.f32 %v559, %v596
        %v598 = vstv %s280
        %v599 = vmul.f32 %v576, %v598
        %v600 = vadd.f32 %v562, %v599
        %v601 = vstv %s281
        %v602 = vadd.f32 %v579, %v601
        %v603 = vmax.f32 %v602, 0.0
        %v604 = vstv %s289
        %v605 = vmul.f32 %v603, %v604
        %v606 = vstv %s282
        %v607 = vadd.f32 %v582, %v606
        %v608 = vmax.f32 %v607, 0.0
        %v609 = vstv %s290
        %v610 = vmul.f32 %v608, %v609
        %v611 = vadd.f32 %v605, %v610
        %v612 = vstv %s283
        %v613 = vadd.f32 %v585, %v612
        %v614 = vmax.f32 %v613, 0.0
        %v615 = vstv %s291
        %v616 = vmul.f32 %v614, %v615
        %v617 = vadd.f32 %v611, %v616
        %v618 = vstv %s284
        %v619 = vadd.f32 %v588, %v618
        %v620 = vmax.f32 %v619, 0.0
        %v621 = vstv %s292
        %v622 = vmul.f32 %v620, %v621
        %v623 = vadd.f32 %v617, %v622
        %v624 = vstv %s285
        %v625 = vadd.f32 %v591, %v624
        %v626 = vmax.f32 %v625, 0.0
        %v627 = vstv %s293
        %v628 = vmul.f32 %v626, %v627
        %v629 = vadd.f32 %v623, %v628
        %v630 = vstv %s286
        %v631 = vadd.f32 %v594, %v630
        %v632 = vmax.f32 %v631, 0.0
        %v633 = vstv %s294
        %v634 = vmul.f32 %v632, %v633
        %v635 = vadd.f32 %v629, %v634
        %v636 = vstv %s287
        %v637 = vadd.f32 %v597, %v636
        %v638 = vmax.f32 %v637, 0.0
        %v639 = vstv %s295
        %v640 = vmul.f32 %v638, %v639
        %v641 = vadd.f32 %v635, %v640
        %v642 = vstv %s288
        %v643 = vadd.f32 %v600, %v642
        %v644 = vmax.f32 %v643, 0.0
        %v645 = vstv %s296
        %v646 = vmul.f32 %v644, %v645
        %v647 = vadd.f32 %v641, %v646
        %v648 = vstv %s297
        %v649 = vadd.f32 %v647, %v648
        %650 = vst [vmem:[%s176] sm:$0x3] %v649
        %s651 = sand.u32 %s93, 1
        %s652 = scalar_lea.sflag [#allocation11], %s651
        %s653 = sand.u32 %s93, 1
        %s654 = smul.addr %s653, 2
        %s655 = scalar_lea.vmem [#allocation12], %s654
        // Predicated region
        $region29: #{tpu_custom_call.1} parent=23 // pred_check
          %p656 = pneg %p103
        $region30: #{tpu_custom_call.1} parent=23 // pred_check_branch
          %658 = sbr.rel (%p656) target = $region32
        $region31: #{tpu_custom_call.1} parent=23 // pred_region
          %s660 = ssub.s32 32, 32
          %661 = vsyncadd %s652, %s660
          %s662 = sadd.s32 %s48, %s47
          %s663 = smul.addr %s662, 32
          %s664 = scalar_lea.hbm %s7, %s663
          %s666 = sshll.u32 %s655, 4
          %s667 = int_to_ptr.vmem [resolvable:$true] %s666
          %669 = dma.vmem_to_hbm [thread:$0]  %s667, 32, %s664, %s652
        $region32: #{tpu_custom_call.1} parent=23 // pred_fallthru
          _
      $region24: #{tpu_custom_call.1} parent=5 // pred_fallthru
        _
      %p670 = scmp.le.s32.totalorder 2, %s38
      // Predicated region
      $region33: #{tpu_custom_call.1} parent=5 // pred_check
        %p671 = pneg %p670
      $region34: #{tpu_custom_call.1} parent=5 // pred_check_branch
        %673 = sbr.rel (%p671) target = $region36
      $region35: #{tpu_custom_call.1} parent=5 // pred_region
        %s674 = ssub.s32 %s38, 2
        // Predicated region
        $region37: #{tpu_custom_call.1} parent=35 // pred_check
          %p675 = pneg %p109
        $region38: #{tpu_custom_call.1} parent=35 // pred_check_branch
          %677 = sbr.rel (%p675) target = $region40
        $region39: #{tpu_custom_call.1} parent=35 // pred_region
          %s678 = sand.u32 %s94, 1
          %s679 = scalar_lea.sflag [#allocation11], %s678
          %s680 = sand.u32 %s94, 1
          %s681 = smul.addr %s680, 2
          %s682 = scalar_lea.vmem [#allocation12], %s681
          %683 = dma.done %s679, 32
        $region40: #{tpu_custom_call.1} parent=35 // pred_fallthru
          _
      $region36: #{tpu_custom_call.1} parent=5 // pred_fallthru
        _
    $region6: #{tpu_custom_call.1} parent=1 // loop_footer
      %s42 = sadd.s32 1, %s38
    $region7: #{tpu_custom_call.1} parent=1 // loop_footer_branch
      %37 = sbr.rel target = $region3
    $region8: #{tpu_custom_call.1} parent=1 // loop_exit
      _
    %684 = vsyncpa [#allocation10], 1
    %s685 = scalar_lea.sflag [#allocation10], 1
    %686 = vsyncpa %s685, 1
    %687 = vsyncpa [#allocation11], 1
    %s688 = scalar_lea.sflag [#allocation11], 1
    %689 = vsyncpa %s688, 1

</llo_original>
